<compile_context>
chip_gen: v7x
topology: tpu7x:2x2x1
jax: 0.10.0
libtpu: 0.0.40
codegen_flags: <defaults>
</compile_context>

<pallas_src>
import math
from functools import partial

import jax
import jax.numpy as jnp
from jax import lax
from jax.experimental import pallas as pl
from jax.experimental.pallas import tpu as pltpu


def _eq_conv2d_kernel(x_ref, w_ref, b_ref, o_ref, *,
                      ksize, wp, l_out, act_gain, leaky):
    # x_ref : (1, C_in, L_in)       padded image, flattened, HW on lanes
    # w_ref : (K*K, CO_TILE, C_in)  pre-scaled, tap-major weights
    # b_ref : (CO_TILE, 1)          bias (broadcast over lanes)
    # o_ref : (1, CO_TILE, L_out)
    acc = None
    for ky in range(ksize):
        for kx in range(ksize):
            t = ky * ksize + kx
            d = ky * wp + kx                       # static shift along lanes
            xs = x_ref[0, :, d:d + l_out]          # (C_in, L_out) contiguous slice
            part = jnp.dot(w_ref[t], xs,
                           preferred_element_type=jnp.float32)
            acc = part if acc is None else acc + part
    y = acc + b_ref[...].astype(jnp.float32)       # (CO_TILE, L_out)
    if act_gain != 1.0:
        y = y * act_gain
    if leaky:
        y = jnp.maximum(y, 0.2 * y)                # leaky_relu(y, 0.2)
    o_ref[0] = y.astype(o_ref.dtype)


def equalized_conv2d_forward(x, weight, bias, *, kernel_size, activate=False,
                             up=False, down=False, gain=1.0):
    assert not up and not down, "up/down resample paths not implemented"
    assert kernel_size % 2 == 1, "only odd kernel sizes supported"
    B, C_in, H, W = x.shape
    C_out = weight.shape[0]
    K = kernel_size
    p = K // 2

    weight_gain = 1.0 / math.sqrt(C_in * K * K)
    act_gain = (math.sqrt(2.0) if activate else 1.0) * float(gain)

    # --- hoisted one-time parameter prep (plain JAX, grid-invariant) ---
    w_taps = weight.astype(jnp.float32) * weight_gain
    w_taps = jnp.transpose(w_taps, (2, 3, 0, 1)).reshape(K * K, C_out, C_in)
    if bias is None:
        bias = jnp.zeros((C_out,), dtype=jnp.float32)
    b2 = bias.reshape(C_out, 1).astype(jnp.float32)

    # --- channel-major, lane-dense layout: pad spatially, flatten HW ---
    extra = 1 if p > 0 else 0                       # tail slack for last tap slice
    x_pad = jnp.pad(x, ((0, 0), (0, 0), (p, p + extra), (p, p)))
    Hp, Wp = H + 2 * p + extra, W + 2 * p
    L_in = Hp * Wp
    L_out = H * Wp                                  # valid outputs at q = h*Wp + w
    xf = x_pad.reshape(B, C_in, L_in)               # free reshape (contiguous)

    # output-channel tiling (second parallel grid axis for megacore)
    co_tile = C_out if (C_out <= 256 or C_out % 256 != 0) else 256
    n_co = pl.cdiv(C_out, co_tile)

    kernel = partial(_eq_conv2d_kernel, ksize=K, wp=Wp, l_out=L_out,
                     act_gain=act_gain, leaky=bool(activate))

    out_flat = pl.pallas_call(
        kernel,
        out_shape=jax.ShapeDtypeStruct((B, C_out, L_out), x.dtype),
        grid_spec=pltpu.PrefetchScalarGridSpec(
            num_scalar_prefetch=0,
            grid=(B, n_co),
            in_specs=[
                pl.BlockSpec((1, C_in, L_in), lambda b, j: (b, 0, 0)),
                pl.BlockSpec((K * K, co_tile, C_in), lambda b, j: (0, j, 0)),
                pl.BlockSpec((co_tile, 1), lambda b, j: (j, 0)),
            ],
            out_specs=pl.BlockSpec((1, co_tile, L_out), lambda b, j: (b, j, 0)),
        ),
        compiler_params=pltpu.CompilerParams(
            dimension_semantics=("parallel", "parallel"),
            vmem_limit_bytes=64 * 1024 * 1024),
    )(xf, w_taps, b2)

    # free reshape + cheap column trim back to NCHW (no transposes)
    out = out_flat.reshape(B, C_out, H, Wp)[:, :, :, :W]
    return out


def _reference_forward(x, weight, bias, *, kernel_size, activate=False, gain=1.0):
    # Pure-JAX reference mirroring the PyTorch forward exactly.
    K = kernel_size
    p = K // 2
    wg = 1.0 / math.sqrt(x.shape[1] * K * K)
    w = weight * wg
    y = lax.conv_general_dilated(x, w, window_strides=(1, 1),
                                 padding=((p, p), (p, p)),
                                 dimension_numbers=("NCHW", "OIHW", "NCHW"))
    if bias is not None:
        y = y + bias[None, :, None, None]
    ag = (math.sqrt(2.0) if activate else 1.0) * gain
    if ag != 1.0:
        y = y * ag
    if activate:
        y = jnp.where(y >= 0, y, 0.2 * y)
    return y


if __name__ == "__main__":
    key = jax.random.PRNGKey(0)
    k1, k2, k3, k4, k5 = jax.random.split(key, 5)

    # Case 1: 3x3 conv, bias, activate=True (typical StyleGAN block conv)
    B, C_in, C_out, H, W, K = 2, 8, 8, 16, 16, 3
    x = jax.random.normal(k1, (B, C_in, H, W), dtype=jnp.float32)
    w3 = jax.random.normal(k2, (C_out, C_in, K, K), dtype=jnp.float32)
    b3 = jax.random.normal(k3, (C_out,), dtype=jnp.float32)

    out = equalized_conv2d_forward(x, w3, b3, kernel_size=K, activate=True)
    out = jax.block_until_ready(out)
    ref = _reference_forward(x, w3, b3, kernel_size=K, activate=True)
    assert out.shape == (B, C_out, H, W)
    assert jnp.allclose(out, ref, atol=1e-4, rtol=1e-4), "3x3 mismatch vs reference"

    # Case 2: 1x1 conv, no activation (ToRGB-style head)
    C_out2, K2 = 4, 1
    w1 = jax.random.normal(k4, (C_out2, C_in, K2, K2), dtype=jnp.float32)
    b1 = jax.random.normal(k5, (C_out2,), dtype=jnp.float32)

    out2 = equalized_conv2d_forward(x, w1, b1, kernel_size=K2, activate=False)
    out2 = jax.block_until_ready(out2)
    ref2 = _reference_forward(x, w1, b1, kernel_size=K2, activate=False)
    assert out2.shape == (B, C_out2, H, W)
    assert jnp.allclose(out2, ref2, atol=1e-4, rtol=1e-4), "1x1 mismatch vs reference"

    print("KERNEL_OK")
</pallas_src>

<mosaic_0001>
module attributes {stable_mosaic.version = 11 : i64} {
  func.func @_eq_conv2d_kernel(%arg0: i32, %arg1: i32, %arg2: memref<1x8x342xf32, #tpu.memory_space<vmem>>, %arg3: memref<9x8x8xf32, #tpu.memory_space<vmem>>, %arg4: memref<8x1xf32, #tpu.memory_space<vmem>>, %arg5: memref<1x8x288xf32, #tpu.memory_space<vmem>>) attributes {dimension_semantics = [#tpu.dimension_semantics<parallel>, #tpu.dimension_semantics<parallel>], iteration_bounds = array<i64: 2, 1>, scalar_prefetch = 0 : i64, scratch_operands = 0 : i64, tpu.core_type = #tpu.core_type<tc>, window_params = [{transform_indices = @transform_0, window_bounds = array<i64: 1, 8, 342>}, {transform_indices = @transform_1, window_bounds = array<i64: 9, 8, 8>}, {transform_indices = @transform_2, window_bounds = array<i64: 8, 1>}, {transform_indices = @transform_3, window_bounds = array<i64: 1, 8, 288>}]} {
    %c0 = arith.constant 0 : index
    %c0_0 = arith.constant 0 : index
    %c0_1 = arith.constant 0 : index
    %0 = vector.load %arg2[%c0, %c0_0, %c0_1] : memref<1x8x342xf32, #tpu.memory_space<vmem>>, vector<1x8x288xf32>
    %1 = vector.shape_cast %0 : vector<1x8x288xf32> to vector<8x288xf32>
    %c0_2 = arith.constant 0 : index
    %c0_3 = arith.constant 0 : index
    %c0_4 = arith.constant 0 : index
    %2 = vector.load %arg3[%c0_2, %c0_3, %c0_4] : memref<9x8x8xf32, #tpu.memory_space<vmem>>, vector<1x8x8xf32>
    %3 = vector.shape_cast %2 : vector<1x8x8xf32> to vector<8x8xf32>
    %cst = arith.constant dense<0.000000e+00> : vector<8x288xf32>
    %4 = tpu.matmul %3, %1, %cst {dimension_numbers = #tpu.dot_dimension_numbers<[1], [0], [0], [1], [0, 0, 1, 1], [], []>} : vector<8x8xf32>, vector<8x288xf32>, vector<8x288xf32> -> vector<8x288xf32>
    %c0_5 = arith.constant 0 : index
    %c0_6 = arith.constant 0 : index
    %c1 = arith.constant 1 : index
    %5 = vector.load %arg2[%c0_5, %c0_6, %c1] : memref<1x8x342xf32, #tpu.memory_space<vmem>>, vector<1x8x288xf32>
    %6 = vector.shape_cast %5 : vector<1x8x288xf32> to vector<8x288xf32>
    %c1_7 = arith.constant 1 : index
    %c0_8 = arith.constant 0 : index
    %c0_9 = arith.constant 0 : index
    %7 = vector.load %arg3[%c1_7, %c0_8, %c0_9] : memref<9x8x8xf32, #tpu.memory_space<vmem>>, vector<1x8x8xf32>
    %8 = vector.shape_cast %7 : vector<1x8x8xf32> to vector<8x8xf32>
    %cst_10 = arith.constant dense<0.000000e+00> : vector<8x288xf32>
    %9 = tpu.matmul %8, %6, %cst_10 {dimension_numbers = #tpu.dot_dimension_numbers<[1], [0], [0], [1], [0, 0, 1, 1], [], []>} : vector<8x8xf32>, vector<8x288xf32>, vector<8x288xf32> -> vector<8x288xf32>
    %10 = arith.addf %4, %9 : vector<8x288xf32>
    %c0_11 = arith.constant 0 : index
    %c0_12 = arith.constant 0 : index
    %c2 = arith.constant 2 : index
    %11 = vector.load %arg2[%c0_11, %c0_12, %c2] : memref<1x8x342xf32, #tpu.memory_space<vmem>>, vector<1x8x288xf32>
    %12 = vector.shape_cast %11 : vector<1x8x288xf32> to vector<8x288xf32>
    %c2_13 = arith.constant 2 : index
    %c0_14 = arith.constant 0 : index
    %c0_15 = arith.constant 0 : index
    %13 = vector.load %arg3[%c2_13, %c0_14, %c0_15] : memref<9x8x8xf32, #tpu.memory_space<vmem>>, vector<1x8x8xf32>
    %14 = vector.shape_cast %13 : vector<1x8x8xf32> to vector<8x8xf32>
    %cst_16 = arith.constant dense<0.000000e+00> : vector<8x288xf32>
    %15 = tpu.matmul %14, %12, %cst_16 {dimension_numbers = #tpu.dot_dimension_numbers<[1], [0], [0], [1], [0, 0, 1, 1], [], []>} : vector<8x8xf32>, vector<8x288xf32>, vector<8x288xf32> -> vector<8x288xf32>
    %16 = arith.addf %10, %15 : vector<8x288xf32>
    %c0_17 = arith.constant 0 : index
    %c0_18 = arith.constant 0 : index
    %c18 = arith.constant 18 : index
    %17 = vector.load %arg2[%c0_17, %c0_18, %c18] : memref<1x8x342xf32, #tpu.memory_space<vmem>>, vector<1x8x288xf32>
    %18 = vector.shape_cast %17 : vector<1x8x288xf32> to vector<8x288xf32>
    %c3 = arith.constant 3 : index
    %c0_19 = arith.constant 0 : index
    %c0_20 = arith.constant 0 : index
    %19 = vector.load %arg3[%c3, %c0_19, %c0_20] : memref<9x8x8xf32, #tpu.memory_space<vmem>>, vector<1x8x8xf32>
    %20 = vector.shape_cast %19 : vector<1x8x8xf32> to vector<8x8xf32>
    %cst_21 = arith.constant dense<0.000000e+00> : vector<8x288xf32>
    %21 = tpu.matmul %20, %18, %cst_21 {dimension_numbers = #tpu.dot_dimension_numbers<[1], [0], [0], [1], [0, 0, 1, 1], [], []>} : vector<8x8xf32>, vector<8x288xf32>, vector<8x288xf32> -> vector<8x288xf32>
    %22 = arith.addf %16, %21 : vector<8x288xf32>
    %c0_22 = arith.constant 0 : index
    %c0_23 = arith.constant 0 : index
    %c19 = arith.constant 19 : index
    %23 = vector.load %arg2[%c0_22, %c0_23, %c19] : memref<1x8x342xf32, #tpu.memory_space<vmem>>, vector<1x8x288xf32>
    %24 = vector.shape_cast %23 : vector<1x8x288xf32> to vector<8x288xf32>
    %c4 = arith.constant 4 : index
    %c0_24 = arith.constant 0 : index
    %c0_25 = arith.constant 0 : index
    %25 = vector.load %arg3[%c4, %c0_24, %c0_25] : memref<9x8x8xf32, #tpu.memory_space<vmem>>, vector<1x8x8xf32>
    %26 = vector.shape_cast %25 : vector<1x8x8xf32> to vector<8x8xf32>
    %cst_26 = arith.constant dense<0.000000e+00> : vector<8x288xf32>
    %27 = tpu.matmul %26, %24, %cst_26 {dimension_numbers = #tpu.dot_dimension_numbers<[1], [0], [0], [1], [0, 0, 1, 1], [], []>} : vector<8x8xf32>, vector<8x288xf32>, vector<8x288xf32> -> vector<8x288xf32>
    %28 = arith.addf %22, %27 : vector<8x288xf32>
    %c0_27 = arith.constant 0 : index
    %c0_28 = arith.constant 0 : index
    %c20 = arith.constant 20 : index
    %29 = vector.load %arg2[%c0_27, %c0_28, %c20] : memref<1x8x342xf32, #tpu.memory_space<vmem>>, vector<1x8x288xf32>
    %30 = vector.shape_cast %29 : vector<1x8x288xf32> to vector<8x288xf32>
    %c5 = arith.constant 5 : index
    %c0_29 = arith.constant 0 : index
    %c0_30 = arith.constant 0 : index
    %31 = vector.load %arg3[%c5, %c0_29, %c0_30] : memref<9x8x8xf32, #tpu.memory_space<vmem>>, vector<1x8x8xf32>
    %32 = vector.shape_cast %31 : vector<1x8x8xf32> to vector<8x8xf32>
    %cst_31 = arith.constant dense<0.000000e+00> : vector<8x288xf32>
    %33 = tpu.matmul %32, %30, %cst_31 {dimension_numbers = #tpu.dot_dimension_numbers<[1], [0], [0], [1], [0, 0, 1, 1], [], []>} : vector<8x8xf32>, vector<8x288xf32>, vector<8x288xf32> -> vector<8x288xf32>
    %34 = arith.addf %28, %33 : vector<8x288xf32>
    %c0_32 = arith.constant 0 : index
    %c0_33 = arith.constant 0 : index
    %c36 = arith.constant 36 : index
    %35 = vector.load %arg2[%c0_32, %c0_33, %c36] : memref<1x8x342xf32, #tpu.memory_space<vmem>>, vector<1x8x288xf32>
    %36 = vector.shape_cast %35 : vector<1x8x288xf32> to vector<8x288xf32>
    %c6 = arith.constant 6 : index
    %c0_34 = arith.constant 0 : index
    %c0_35 = arith.constant 0 : index
    %37 = vector.load %arg3[%c6, %c0_34, %c0_35] : memref<9x8x8xf32, #tpu.memory_space<vmem>>, vector<1x8x8xf32>
    %38 = vector.shape_cast %37 : vector<1x8x8xf32> to vector<8x8xf32>
    %cst_36 = arith.constant dense<0.000000e+00> : vector<8x288xf32>
    %39 = tpu.matmul %38, %36, %cst_36 {dimension_numbers = #tpu.dot_dimension_numbers<[1], [0], [0], [1], [0, 0, 1, 1], [], []>} : vector<8x8xf32>, vector<8x288xf32>, vector<8x288xf32> -> vector<8x288xf32>
    %40 = arith.addf %34, %39 : vector<8x288xf32>
    %c0_37 = arith.constant 0 : index
    %c0_38 = arith.constant 0 : index
    %c37 = arith.constant 37 : index
    %41 = vector.load %arg2[%c0_37, %c0_38, %c37] : memref<1x8x342xf32, #tpu.memory_space<vmem>>, vector<1x8x288xf32>
    %42 = vector.shape_cast %41 : vector<1x8x288xf32> to vector<8x288xf32>
    %c7 = arith.constant 7 : index
    %c0_39 = arith.constant 0 : index
    %c0_40 = arith.constant 0 : index
    %43 = vector.load %arg3[%c7, %c0_39, %c0_40] : memref<9x8x8xf32, #tpu.memory_space<vmem>>, vector<1x8x8xf32>
    %44 = vector.shape_cast %43 : vector<1x8x8xf32> to vector<8x8xf32>
    %cst_41 = arith.constant dense<0.000000e+00> : vector<8x288xf32>
    %45 = tpu.matmul %44, %42, %cst_41 {dimension_numbers = #tpu.dot_dimension_numbers<[1], [0], [0], [1], [0, 0, 1, 1], [], []>} : vector<8x8xf32>, vector<8x288xf32>, vector<8x288xf32> -> vector<8x288xf32>
    %46 = arith.addf %40, %45 : vector<8x288xf32>
    %c0_42 = arith.constant 0 : index
    %c0_43 = arith.constant 0 : index
    %c38 = arith.constant 38 : index
    %47 = vector.load %arg2[%c0_42, %c0_43, %c38] : memref<1x8x342xf32, #tpu.memory_space<vmem>>, vector<1x8x288xf32>
    %48 = vector.shape_cast %47 : vector<1x8x288xf32> to vector<8x288xf32>
    %c8 = arith.constant 8 : index
    %c0_44 = arith.constant 0 : index
    %c0_45 = arith.constant 0 : index
    %49 = vector.load %arg3[%c8, %c0_44, %c0_45] : memref<9x8x8xf32, #tpu.memory_space<vmem>>, vector<1x8x8xf32>
    %50 = vector.shape_cast %49 : vector<1x8x8xf32> to vector<8x8xf32>
    %cst_46 = arith.constant dense<0.000000e+00> : vector<8x288xf32>
    %51 = tpu.matmul %50, %48, %cst_46 {dimension_numbers = #tpu.dot_dimension_numbers<[1], [0], [0], [1], [0, 0, 1, 1], [], []>} : vector<8x8xf32>, vector<8x288xf32>, vector<8x288xf32> -> vector<8x288xf32>
    %52 = arith.addf %46, %51 : vector<8x288xf32>
    %c0_47 = arith.constant 0 : index
    %c0_48 = arith.constant 0 : index
    %53 = vector.load %arg4[%c0_47, %c0_48] : memref<8x1xf32, #tpu.memory_space<vmem>>, vector<8x1xf32>
    %54 = vector.broadcast %53 : vector<8x1xf32> to vector<8x288xf32>
    %55 = arith.addf %52, %54 : vector<8x288xf32>
    %cst_49 = arith.constant 1.41421354 : f32
    %56 = vector.broadcast %cst_49 : f32 to vector<8x288xf32>
    %57 = arith.mulf %55, %56 : vector<8x288xf32>
    %cst_50 = arith.constant 2.000000e-01 : f32
    %58 = vector.broadcast %cst_50 : f32 to vector<8x288xf32>
    %59 = arith.mulf %58, %57 : vector<8x288xf32>
    %60 = arith.maximumf %57, %59 : vector<8x288xf32>
    %c0_51 = arith.constant 0 : index
    %c0_52 = arith.constant 0 : index
    %c0_53 = arith.constant 0 : index
    %61 = vector.load %arg5[%c0_51, %c0_52, %c0_53] : memref<1x8x288xf32, #tpu.memory_space<vmem>>, vector<1x8x288xf32>
    %62 = vector.shape_cast %61 : vector<1x8x288xf32> to vector<8x288xf32>
    %63 = vector.shape_cast %60 : vector<8x288xf32> to vector<1x8x288xf32>
    tpu.vector_store %arg5[%c0_51, %c0_52, %c0_53], %63 {strides = array<i32>} : memref<1x8x288xf32, #tpu.memory_space<vmem>>, vector<1x8x288xf32>,
    return
  }
  func.func @transform_0(%arg0: i32, %arg1: i32) -> (i32, i32, i32) {
    %c0_i32 = arith.constant 0 : i32
    %c0_i32_0 = arith.constant 0 : i32
    %c0_i32_1 = arith.constant 0 : i32
    return %arg0, %c0_i32, %c0_i32_0 : i32, i32, i32
  }
  func.func @transform_1(%arg0: i32, %arg1: i32) -> (i32, i32, i32) {
    %c0_i32 = arith.constant 0 : i32
    %c0_i32_0 = arith.constant 0 : i32
    %c0_i32_1 = arith.constant 0 : i32
    return %c0_i32, %arg1, %c0_i32_0 : i32, i32, i32
  }
  func.func @transform_2(%arg0: i32, %arg1: i32) -> (i32, i32) {
    %c0_i32 = arith.constant 0 : i32
    %c0_i32_0 = arith.constant 0 : i32
    return %arg1, %c0_i32 : i32, i32
  }
  func.func @transform_3(%arg0: i32, %arg1: i32) -> (i32, i32, i32) {
    %c0_i32 = arith.constant 0 : i32
    %c0_i32_0 = arith.constant 0 : i32
    return %arg0, %arg1, %c0_i32 : i32, i32, i32
  }
}

</mosaic_0001>

<llo_original>
// kernel: tpu_custom_call.1
$region0: #{tpu_custom_call.1}
  #allocation0 [shape = 'u32[]', space=smem, size = 0x4, offset = 0x4, fixed_abs, tag = 'smem constant byte address 0x4 - core index']
  #allocation1 [shape = 'u32[144,128]{1,0:T(1,128)}', space=vmem, size = 0x12000, scoped, tag = 'internal scratch']
  %s0 = inlined_call_operand.hbm [shape: f32[2,8,342], index: 0, kind: input, shape index: {}]
  %s1 = inlined_call_operand.hbm [shape: f32[9,8,8], index: 1, kind: input, shape index: {}]
  %s2 = inlined_call_operand.hbm [shape: f32[8,1], index: 2, kind: input, shape index: {}]
  %s3 = inlined_call_operand.hbm [shape: f32[2,8,288], index: 3, kind: output, shape index: {}]
  %s4 = sld [smem:[#allocation0]]
  $region57: #{tpu_custom_call.1} parent=0
    _
  %s6 = ssub.s32 1, %s4
  %s7 = scalar_select 0, %s6, %s4
  $region1: #{tpu_custom_call.1} parent=0
    #allocation2 [shape = 'u8[24576]{0}', space=vmem, size = 0x6000, scoped, tag = 'input window, operand 0']
    #allocation3 [shape = 's32[2]{0}', space=sflag, size = 0x8, scoped, tag = 'scoped memory for tpu_custom_call.1']
    #allocation4 [shape = 's32[2]{0}', space=sflag, size = 0x8, scoped, tag = 'scoped memory for tpu_custom_call.1']
    #allocation5 [shape = 'u8[36864]{0}', space=vmem, size = 0x9000, scoped, tag = 'input window, operand 1, single buffered']
    #allocation6 [shape = 's32[1]{0}', space=sflag, size = 0x4, scoped, tag = 'scoped memory for tpu_custom_call.1']
    #allocation7 [shape = 'u8[4096]{0}', space=vmem, size = 0x1000, scoped, tag = 'input window, operand 2, single buffered']
    #allocation8 [shape = 'u8[24576]{0}', space=vmem, size = 0x6000, scoped, tag = 'output window, operand 0']
    %8 = vsyncpa [#allocation3], 0
    %s9 = scalar_lea.sflag [#allocation3], 1
    %10 = vsyncpa %s9, 0
    %11 = vsyncpa [#allocation6], 0
    %12 = vsyncpa [#allocation4], 0
    %s13 = scalar_lea.sflag [#allocation4], 1
    %14 = vsyncpa %s13, 0
    loop: start=0, step=1, limit=4
    $region2: #{tpu_custom_call.1} parent=1 // loop_pre_header
      _
    $region3: #{tpu_custom_call.1} parent=1 // loop_header
      %s16 = sphi 0, %s20
      %p17 = scmp.ge.s32.totalorder %s16, 4
      %s23 = sphi 0, %s35
      %s24 = sphi 0, %s31
      %s25 = sphi 0, %s23
      %s26 = sphi 0, %s24
      %s27 = sphi 0, %s25
      %s28 = sphi 0, %s26
      %s38 = sphi 0, %s40
      %s41 = sphi 0, %s38
      %s42 = sphi 0, %s41
      %s58 = sphi 0, %s42
      %s64 = sphi 0, %s66
      %s67 = sphi 0, %s64
      %s68 = sphi 0, %s67
      %s84 = sphi 0, %s68
      %s90 = sphi 0, %s92
      %s93 = sphi 0, %s90
      %s94 = sphi 0, %s93
      %s110 = sphi 0, %s94
      %s118 = sphi 0, %s120
      %s121 = sphi 0, %s118
      %s122 = sphi 0, %s121
      %s138 = sphi 0, %s122
    $region4: #{tpu_custom_call.1} parent=1 // loop_header_branch
      %19 = sbr.rel (%p17) target = $region8
    $region5: #{tpu_custom_call.1} parent=1 // loop_body
      %s21 = ssub.s32 %s16, 1
      %s22 = ssub.s32 %s16, 2
      %s29 = sadd.s32 1, %s24
      %p30 = scmp.ge.s32.totalorder %s29, 1
      %s31 = scalar_select %p30, 0, %s29
      %s32 = sadd.s32 1, %s23
      %s33 = scalar_select %p30, %s32, %s23
      %p34 = scmp.ge.s32.totalorder %s33, 2
      %s35 = scalar_select %p34, 0, %s33
      %s36 = ssub.s32 %s23, %s35
      %p37 = scmp.eq.s32.totalorder %s36, 0
      %s39 = sadd.s32 %s38, 1
      %s40 = scalar_select %p37, %s38, %s39
      %p43 = pneg %p37
      %p44 = scmp.eq.s32.totalorder %s16, 1
      %p45 = por %p43, %p44
      %p46 = scmp.ne.s32.totalorder %s38, %s41
      %p47 = scmp.eq.s32.totalorder %s16, 0
      %p48 = por %p46, %p47
      %p49 = scmp.ne.s32.totalorder %s38, %s41
      %p50 = scmp.eq.s32.totalorder %s21, 1
      %p51 = por %p49, %p50
      %p52 = scmp.ne.s32.totalorder %s41, %s42
      %p53 = scmp.eq.s32.totalorder %s21, 0
      %p54 = por %p52, %p53
      %p55 = scmp.ne.s32.totalorder %s41, %s42
      %p56 = scmp.eq.s32.totalorder %s22, 1
      %p57 = por %p55, %p56
      %p59 = scmp.ne.s32.totalorder %s42, %s58
      %p60 = scmp.eq.s32.totalorder %s22, 0
      %p61 = por %p59, %p60
      %s62 = ssub.s32 %s24, %s31
      %p63 = scmp.eq.s32.totalorder %s62, 0
      %s65 = sadd.s32 %s64, 1
      %s66 = scalar_select %p63, %s64, %s65
      %p69 = pneg %p63
      %p70 = scmp.eq.s32.totalorder %s16, 1
      %p71 = por %p69, %p70
      %p72 = scmp.ne.s32.totalorder %s64, %s67
      %p73 = scmp.eq.s32.totalorder %s16, 0
      %p74 = por %p72, %p73
      %p75 = scmp.ne.s32.totalorder %s64, %s67
      %p76 = scmp.eq.s32.totalorder %s21, 1
      %p77 = por %p75, %p76
      %p78 = scmp.ne.s32.totalorder %s67, %s68
      %p79 = scmp.eq.s32.totalorder %s21, 0
      %p80 = por %p78, %p79
      %p81 = scmp.ne.s32.totalorder %s67, %s68
      %p82 = scmp.eq.s32.totalorder %s22, 1
      %p83 = por %p81, %p82
      %p85 = scmp.ne.s32.totalorder %s68, %s84
      %p86 = scmp.eq.s32.totalorder %s22, 0
      %p87 = por %p85, %p86
      %s88 = ssub.s32 %s24, %s31
      %p89 = scmp.eq.s32.totalorder %s88, 0
      %s91 = sadd.s32 %s90, 1
      %s92 = scalar_select %p89, %s90, %s91
      %p95 = pneg %p89
      %p96 = scmp.eq.s32.totalorder %s16, 1
      %p97 = por %p95, %p96
      %p98 = scmp.ne.s32.totalorder %s90, %s93
      %p99 = scmp.eq.s32.totalorder %s16, 0
      %p100 = por %p98, %p99
      %p101 = scmp.ne.s32.totalorder %s90, %s93
      %p102 = scmp.eq.s32.totalorder %s21, 1
      %p103 = por %p101, %p102
      %p104 = scmp.ne.s32.totalorder %s93, %s94
      %p105 = scmp.eq.s32.totalorder %s21, 0
      %p106 = por %p104, %p105
      %p107 = scmp.ne.s32.totalorder %s93, %s94
      %p108 = scmp.eq.s32.totalorder %s22, 1
      %p109 = por %p107, %p108
      %p111 = scmp.ne.s32.totalorder %s94, %s110
      %p112 = scmp.eq.s32.totalorder %s22, 0
      %p113 = por %p111, %p112
      %s114 = ssub.s32 %s23, %s35
      %s115 = ssub.s32 %s24, %s31
      %s116 = sor.u32 %s114, %s115
      %p117 = scmp.eq.s32.totalorder %s116, 0
      %s119 = sadd.s32 %s118, 1
      %s120 = scalar_select %p117, %s118, %s119
      %p123 = pneg %p117
      %p124 = scmp.eq.s32.totalorder %s16, 1
      %p125 = por %p123, %p124
      %p126 = scmp.ne.s32.totalorder %s118, %s121
      %p127 = scmp.eq.s32.totalorder %s16, 0
      %p128 = por %p126, %p127
      %p129 = scmp.ne.s32.totalorder %s118, %s121
      %p130 = scmp.eq.s32.totalorder %s21, 1
      %p131 = por %p129, %p130
      %p132 = scmp.ne.s32.totalorder %s121, %s122
      %p133 = scmp.eq.s32.totalorder %s21, 0
      %p134 = por %p132, %p133
      %p135 = scmp.ne.s32.totalorder %s121, %s122
      %p136 = scmp.eq.s32.totalorder %s22, 1
      %p137 = por %p135, %p136
      %p139 = scmp.ne.s32.totalorder %s122, %s138
      %p140 = scmp.eq.s32.totalorder %s22, 0
      %p141 = por %p139, %p140
      %p142 = scmp.le.s32.totalorder 1, %s16
      %p143 = scmp.lt.s32.totalorder %s16, 3
      %p144 = pnand %p142, %p143
      %p145 = pneg %p144
      // Predicated region
      $region9: #{tpu_custom_call.1} parent=5 // pred_check
        _
      $region10: #{tpu_custom_call.1} parent=5 // pred_check_branch
        %147 = sbr.rel (%p144) target = $region12
      $region11: #{tpu_custom_call.1} parent=5 // pred_region
        %s148 = ssub.s32 %s16, 1
        // Predicated region
        $region13: #{tpu_custom_call.1} parent=11 // pred_check
          %p149 = pneg %p80
        $region14: #{tpu_custom_call.1} parent=11 // pred_check_branch
          %151 = sbr.rel (%p149) target = $region16
        $region15: #{tpu_custom_call.1} parent=11 // pred_region
          %s153 = ssub.s32 1152, 1152
          %154 = vsyncadd [#allocation6], %s153
          %s155 = smul.addr %s26, 128
          %s156 = scalar_lea.hbm %s1, %s155
          %s157 = sshll.u32 [#allocation5], 4
          %s158 = int_to_ptr.vmem [resolvable:$true] %s157
          %163 = dma.hbm_to_vmem [thread:$0]  %s156, 1152, %s158, [#allocation6], 128, 128, 8
        $region16: #{tpu_custom_call.1} parent=11 // pred_fallthru
          _
        // Predicated region
        $region17: #{tpu_custom_call.1} parent=11 // pred_check
          %p164 = pneg %p106
        $region18: #{tpu_custom_call.1} parent=11 // pred_check_branch
          %166 = sbr.rel (%p164) target = $region20
        $region19: #{tpu_custom_call.1} parent=11 // pred_region
          %s168 = ssub.s32 128, 128
          %169 = vsyncadd [#allocation6], %s168
          %s170 = smul.addr %s26, 128
          %s171 = scalar_lea.hbm %s2, %s170
          %s173 = sshll.u32 [#allocation7], 4
          %s174 = int_to_ptr.vmem [resolvable:$true] %s173
          %176 = dma.hbm_to_vmem [thread:$0]  %s171, 128, %s174, [#allocation6]
        $region20: #{tpu_custom_call.1} parent=11 // pred_fallthru
          _
      $region12: #{tpu_custom_call.1} parent=5 // pred_fallthru
        _
      %p177 = scmp.lt.s32.totalorder %s16, 2
      // Predicated region
      $region21: #{tpu_custom_call.1} parent=5 // pred_check
        %p178 = pneg %p177
      $region22: #{tpu_custom_call.1} parent=5 // pred_check_branch
        %180 = sbr.rel (%p178) target = $region24
      $region23: #{tpu_custom_call.1} parent=5 // pred_region
        // Predicated region
        $region25: #{tpu_custom_call.1} parent=23 // pred_check
          %p181 = pneg %p48
        $region26: #{tpu_custom_call.1} parent=23 // pred_check_branch
          %183 = sbr.rel (%p181) target = $region28
        $region27: #{tpu_custom_call.1} parent=23 // pred_region
          %s184 = sand.u32 %s38, 1
          %s185 = scalar_lea.sflag [#allocation3], %s184
          %s186 = sand.u32 %s38, 1
          %s187 = smul.addr %s186, 24
          %s188 = scalar_lea.vmem [#allocation2], %s187
          %s190 = ssub.s32 384, 384
          %191 = vsyncadd %s185, %s190
          %s192 = smul.addr %s23, 3
          %s193 = smul.addr %s192, 128
          %s194 = scalar_lea.hbm %s0, %s193
          %s196 = sshll.u32 %s188, 4
          %s197 = int_to_ptr.vmem [resolvable:$true] %s196
          %199 = dma.hbm_to_vmem [thread:$0]  %s194, 384, %s197, %s185
        $region28: #{tpu_custom_call.1} parent=23 // pred_fallthru
          _
      $region24: #{tpu_custom_call.1} parent=5 // pred_fallthru
        _
      %p200 = scmp.le.s32.totalorder 1, %s16
      %p201 = scmp.lt.s32.totalorder %s16, 3
      %p202 = pnand %p200, %p201
      %p203 = pneg %p202
      // Predicated region
      $region29: #{tpu_custom_call.1} parent=5 // pred_check
        _
      $region30: #{tpu_custom_call.1} parent=5 // pred_check_branch
        %205 = sbr.rel (%p202) target = $region32
      $region31: #{tpu_custom_call.1} parent=5 // pred_region
        %s206 = ssub.s32 %s16, 1
        %s207 = sand.u32 %s41, 1
        %s208 = scalar_lea.sflag [#allocation3], %s207
        %s209 = sand.u32 %s41, 1
        %s210 = smul.addr %s209, 24
        %s211 = scalar_lea.vmem [#allocation2], %s210
        // Predicated region
        $region33: #{tpu_custom_call.1} parent=31 // pred_check
          %p212 = pneg %p54
        $region34: #{tpu_custom_call.1} parent=31 // pred_check_branch
          %214 = sbr.rel (%p212) target = $region36
        $region35: #{tpu_custom_call.1} parent=31 // pred_region
          %215 = dma.done %s208, 384
        $region36: #{tpu_custom_call.1} parent=31 // pred_fallthru
          _
        // Predicated region
        $region37: #{tpu_custom_call.1} parent=31 // pred_check
          %p216 = pneg %p80
        $region38: #{tpu_custom_call.1} parent=31 // pred_check_branch
          %218 = sbr.rel (%p216) target = $region40
        $region39: #{tpu_custom_call.1} parent=31 // pred_region
          %219 = dma.done [#allocation6], 1152
        $region40: #{tpu_custom_call.1} parent=31 // pred_fallthru
          _
        // Predicated region
        $region41: #{tpu_custom_call.1} parent=31 // pred_check
          %p220 = pneg %p106
        $region42: #{tpu_custom_call.1} parent=31 // pred_check_branch
          %222 = sbr.rel (%p220) target = $region44
        $region43: #{tpu_custom_call.1} parent=31 // pred_region
          %223 = dma.done [#allocation6], 128
        $region44: #{tpu_custom_call.1} parent=31 // pred_fallthru
          _
        %s224 = sand.u32 %s41, 1
        %s225 = scalar_lea.sflag [#allocation3], %s224
        %s226 = sand.u32 %s41, 1
        %s227 = smul.addr %s226, 24
        %s228 = scalar_lea.vmem [#allocation2], %s227
        %p229 = pneg %p54
        %p230 = pneg %p51
        %p231 = pneg %p80
        %p232 = pneg %p77
        %p233 = pneg %p106
        %p234 = pneg %p103
        %p235 = pneg %p134
        %p236 = pneg %p131
        %s237 = sand.u32 %s121, 1
        %s238 = scalar_lea.sflag [#allocation4], %s237
        %s239 = sand.u32 %s121, 1
        %s240 = smul.addr %s239, 24
        %s241 = scalar_lea.vmem [#allocation8], %s240
        %v242 = vld [vmem:[%s211] sm:$0xff]
        %v243 = vld [vmem:[%s211 + $0x8] sm:$0xff]
        %v244 = vld [vmem:[%s211 + $0x10] sm:$0xff]
        %v245 = vld [vmem:[#allocation5] sm:$0xff]
        %s246 = scalar_lea.vmem [#allocation5], 8
        %v247 = vld [vmem:[%s246] sm:$0xff]
        %251 = vrot.lane.b32.xlu0 %v242, 127
        %v252 = vpop.permute.xlu0 %251
        %253 = vrot.lane.b32.xlu0 %v243, 127
        %v254 = vpop.permute.xlu0 %253
        %255 = vrot.lane.b32.xlu0 %v244, 127
        %v256 = vpop.permute.xlu0 %255
        %vm257 = vcmask 1039360
        %v258 = vsel %vm257, %v252, %v254
        %v259 = vsel %vm257, %v254, %v256
        %vm263 = vcmask 64512
        %v265 = vsel %vm263, %v247, 0
        %267 = vmatprep.subr.mxu0 %v259
        %268 = vmatpush1.msra.mxu0 %v258
        %269 = vmatprep.subr.mxu0 0.0
        %270 = vmatpush1.msra.mxu0 0.0
        %271 = vmatprep.subr.mxu0 0.0
        %272 = vmatpush1.msra.mxu0 0.0
        %273 = vmatprep.subr.mxu0 0.0
        %274 = vmatpush1.msra.mxu0 0.0
        %275 = vmatprep.subr.mxu0 0.0
        %276 = vmatpush1.msra.mxu0 0.0
        %277 = vmatprep.subr.mxu0 0.0
        %278 = vmatpush1.msra.mxu0 0.0
        %279 = vmatprep.subr.mxu0 0.0
        %280 = vmatpush1.msra.mxu0 0.0
        %281 = vmatprep.subr.mxu0 0.0
        %282 = vmatpush1.msra.mxu0 0.0
        %283 = vmatprep.subr.mxu0 0.0
        %284 = vmatpush1.msra.mxu0 0.0
        %285 = vmatprep.subr.mxu0 0.0
        %286 = vmatpush1.msra.mxu0 0.0
        %287 = vmatprep.subr.mxu0 0.0
        %288 = vmatpush1.msra.mxu0 0.0
        %289 = vmatprep.subr.mxu0 0.0
        %290 = vmatpush1.msra.mxu0 0.0
        %291 = vmatprep.subr.mxu0 0.0
        %292 = vmatpush1.msra.mxu0 0.0
        %293 = vmatprep.subr.mxu0 0.0
        %294 = vmatpush1.msra.mxu0 0.0
        %295 = vmatprep.subr.mxu0 0.0
        %296 = vmatpush1.msra.mxu0 0.0
        %297 = vmatprep.subr.mxu0 0.0
        %298 = vmatpush1.msra.mxu0 0.0
        %299 = vmatprep.subr.mxu0 0.0
        %300 = vmatpush1.msra.mxu0 0.0
        %301 = vmatprep.subr.mxu0 0.0
        %302 = vmatpush1.msra.mxu0 0.0
        %303 = vmatprep.subr.mxu0 0.0
        %304 = vmatpush1.msra.mxu0 0.0
        %305 = vmatprep.subr.mxu0 0.0
        %306 = vmatpush1.msra.mxu0 0.0
        %307 = vmatprep.subr.mxu0 0.0
        %308 = vmatpush1.msra.mxu0 0.0
        %309 = vmatprep.subr.mxu0 0.0
        %310 = vmatpush1.msra.mxu0 0.0
        %311 = vmatprep.subr.mxu0 0.0
        %312 = vmatpush1.msra.mxu0 0.0
        %313 = vmatprep.subr.mxu0 0.0
        %314 = vmatpush1.msra.mxu0 0.0
        %315 = vmatprep.subr.mxu0 0.0
        %316 = vmatpush1.msra.mxu0 0.0
        %317 = vmatprep.subr.mxu0 0.0
        %318 = vmatpush1.msra.mxu0 0.0
        %319 = vmatprep.subr.mxu0 0.0
        %320 = vmatpush1.msra.mxu0 0.0
        %321 = vmatprep.subr.mxu0 0.0
        %322 = vmatpush1.msra.mxu0 0.0
        %323 = vmatprep.subr.mxu0 0.0
        %324 = vmatpush1.msra.mxu0 0.0
        %325 = vmatprep.subr.mxu0 0.0
        %326 = vmatpush1.msra.mxu0 0.0
        %327 = vmatprep.subr.mxu0 0.0
        %328 = vmatpush1.msra.mxu0 0.0
        %329 = vmatprep.subr.mxu0 0.0
        %330 = vmatpush1.msra.mxu0 0.0
        %331 = vmatprep.mubr.f32.mxu0 0.0
        %332 = vmatmul.mubr.f32.gmra.mrb[0].mxu0 %v265
        %v333 = vpop.f32.mrb[0].mxu0
        %v334 = vadd.f32 0.0, %v333
        %v335 = vpop.f32.mrb[0].mxu0
        %v336 = vadd.f32 0.0, %v335
        %337 = vdwg.mxu0
        %338 = vmatprep.subr.mxu0 0.0
        %339 = vmatpush1.msra.mxu0 %v256
        %340 = vmatprep.subr.mxu0 0.0
        %341 = vmatpush1.msra.mxu0 0.0
        %342 = vmatprep.subr.mxu0 0.0
        %343 = vmatpush1.msra.mxu0 0.0
        %344 = vmatprep.subr.mxu0 0.0
        %345 = vmatpush1.msra.mxu0 0.0
        %346 = vmatprep.subr.mxu0 0.0
        %347 = vmatpush1.msra.mxu0 0.0
        %348 = vmatprep.subr.mxu0 0.0
        %349 = vmatpush1.msra.mxu0 0.0
        %350 = vmatprep.subr.mxu0 0.0
        %351 = vmatpush1.msra.mxu0 0.0
        %352 = vmatprep.subr.mxu0 0.0
        %353 = vmatpush1.msra.mxu0 0.0
        %354 = vmatprep.subr.mxu0 0.0
        %355 = vmatpush1.msra.mxu0 0.0
        %356 = vmatprep.subr.mxu0 0.0
        %357 = vmatpush1.msra.mxu0 0.0
        %358 = vmatprep.subr.mxu0 0.0
        %359 = vmatpush1.msra.mxu0 0.0
        %360 = vmatprep.subr.mxu0 0.0
        %361 = vmatpush1.msra.mxu0 0.0
        %362 = vmatprep.subr.mxu0 0.0
        %363 = vmatpush1.msra.mxu0 0.0
        %364 = vmatprep.subr.mxu0 0.0
        %365 = vmatpush1.msra.mxu0 0.0
        %366 = vmatprep.subr.mxu0 0.0
        %367 = vmatpush1.msra.mxu0 0.0
        %368 = vmatprep.subr.mxu0 0.0
        %369 = vmatpush1.msra.mxu0 0.0
        %370 = vmatprep.subr.mxu0 0.0
        %371 = vmatpush1.msra.mxu0 0.0
        %372 = vmatprep.subr.mxu0 0.0
        %373 = vmatpush1.msra.mxu0 0.0
        %374 = vmatprep.subr.mxu0 0.0
        %375 = vmatpush1.msra.mxu0 0.0
        %376 = vmatprep.subr.mxu0 0.0
        %377 = vmatpush1.msra.mxu0 0.0
        %378 = vmatprep.subr.mxu0 0.0
        %379 = vmatpush1.msra.mxu0 0.0
        %380 = vmatprep.subr.mxu0 0.0
        %381 = vmatpush1.msra.mxu0 0.0
        %382 = vmatprep.subr.mxu0 0.0
        %383 = vmatpush1.msra.mxu0 0.0
        %384 = vmatprep.subr.mxu0 0.0
        %385 = vmatpush1.msra.mxu0 0.0
        %386 = vmatprep.subr.mxu0 0.0
        %387 = vmatpush1.msra.mxu0 0.0
        %388 = vmatprep.subr.mxu0 0.0
        %389 = vmatpush1.msra.mxu0 0.0
        %390 = vmatprep.subr.mxu0 0.0
        %391 = vmatpush1.msra.mxu0 0.0
        %392 = vmatprep.subr.mxu0 0.0
        %393 = vmatpush1.msra.mxu0 0.0
        %394 = vmatprep.subr.mxu0 0.0
        %395 = vmatpush1.msra.mxu0 0.0
        %396 = vmatprep.subr.mxu0 0.0
        %397 = vmatpush1.msra.mxu0 0.0
        %398 = vmatprep.subr.mxu0 0.0
        %399 = vmatpush1.msra.mxu0 0.0
        %400 = vmatprep.subr.mxu0 0.0
        %401 = vmatpush1.msra.mxu0 0.0
        %402 = vmatprep.mubr.f32.mxu0 0.0
        %403 = vmatmul.mubr.f32.gmra.mrb[0].mxu0 %v265
        %v404 = vpop.f32.mrb[0].mxu0
        %v405 = vadd.f32 0.0, %v404
        %v406 = vpop.f32.mrb[0].mxu0
        %407 = vdwg.mxu0
        %v409 = vsel %vm263, %v245, 0
        %411 = vmatprep.subr.mxu0 %v243
        %412 = vmatpush1.msra.mxu0 %v242
        %413 = vmatprep.subr.mxu0 0.0
        %414 = vmatpush1.msra.mxu0 0.0
        %415 = vmatprep.subr.mxu0 0.0
        %416 = vmatpush1.msra.mxu0 0.0
        %417 = vmatprep.subr.mxu0 0.0
        %418 = vmatpush1.msra.mxu0 0.0
        %419 = vmatprep.subr.mxu0 0.0
        %420 = vmatpush1.msra.mxu0 0.0
        %421 = vmatprep.subr.mxu0 0.0
        %422 = vmatpush1.msra.mxu0 0.0
        %423 = vmatprep.subr.mxu0 0.0
        %424 = vmatpush1.msra.mxu0 0.0
        %425 = vmatprep.subr.mxu0 0.0
        %426 = vmatpush1.msra.mxu0 0.0
        %427 = vmatprep.subr.mxu0 0.0
        %428 = vmatpush1.msra.mxu0 0.0
        %429 = vmatprep.subr.mxu0 0.0
        %430 = vmatpush1.msra.mxu0 0.0
        %431 = vmatprep.subr.mxu0 0.0
        %432 = vmatpush1.msra.mxu0 0.0
        %433 = vmatprep.subr.mxu0 0.0
        %434 = vmatpush1.msra.mxu0 0.0
        %435 = vmatprep.subr.mxu0 0.0
        %436 = vmatpush1.msra.mxu0 0.0
        %437 = vmatprep.subr.mxu0 0.0
        %438 = vmatpush1.msra.mxu0 0.0
        %439 = vmatprep.subr.mxu0 0.0
        %440 = vmatpush1.msra.mxu0 0.0
        %441 = vmatprep.subr.mxu0 0.0
        %442 = vmatpush1.msra.mxu0 0.0
        %443 = vmatprep.subr.mxu0 0.0
        %444 = vmatpush1.msra.mxu0 0.0
        %445 = vmatprep.subr.mxu0 0.0
        %446 = vmatpush1.msra.mxu0 0.0
        %447 = vmatprep.subr.mxu0 0.0
        %448 = vmatpush1.msra.mxu0 0.0
        %449 = vmatprep.subr.mxu0 0.0
        %450 = vmatpush1.msra.mxu0 0.0
        %451 = vmatprep.subr.mxu0 0.0
        %452 = vmatpush1.msra.mxu0 0.0
        %453 = vmatprep.subr.mxu0 0.0
        %454 = vmatpush1.msra.mxu0 0.0
        %455 = vmatprep.subr.mxu0 0.0
        %456 = vmatpush1.msra.mxu0 0.0
        %457 = vmatprep.subr.mxu0 0.0
        %458 = vmatpush1.msra.mxu0 0.0
        %459 = vmatprep.subr.mxu0 0.0
        %460 = vmatpush1.msra.mxu0 0.0
        %461 = vmatprep.subr.mxu0 0.0
        %462 = vmatpush1.msra.mxu0 0.0
        %463 = vmatprep.subr.mxu0 0.0
        %464 = vmatpush1.msra.mxu0 0.0
        %465 = vmatprep.subr.mxu0 0.0
        %466 = vmatpush1.msra.mxu0 0.0
        %467 = vmatprep.subr.mxu0 0.0
        %468 = vmatpush1.msra.mxu0 0.0
        %469 = vmatprep.subr.mxu0 0.0
        %470 = vmatpush1.msra.mxu0 0.0
        %471 = vmatprep.subr.mxu0 0.0
        %472 = vmatpush1.msra.mxu0 0.0
        %473 = vmatprep.subr.mxu0 0.0
        %474 = vmatpush1.msra.mxu0 0.0
        %475 = vmatprep.mubr.f32.mxu0 0.0
        %476 = vmatmul.mubr.f32.gmra.mrb[0].mxu0 %v409
        %v477 = vpop.f32.mrb[0].mxu0
        %v478 = vadd.f32 %v334, %v477
        %v479 = vpop.f32.mrb[0].mxu0
        %v480 = vadd.f32 %v336, %v479
        %481 = vdwg.mxu0
        %482 = vmatprep.subr.mxu0 0.0
        %483 = vmatpush1.msra.mxu0 %v244
        %484 = vmatprep.subr.mxu0 0.0
        %485 = vmatpush1.msra.mxu0 0.0
        %486 = vmatprep.subr.mxu0 0.0
        %487 = vmatpush1.msra.mxu0 0.0
        %488 = vmatprep.subr.mxu0 0.0
        %489 = vmatpush1.msra.mxu0 0.0
        %490 = vmatprep.subr.mxu0 0.0
        %491 = vmatpush1.msra.mxu0 0.0
        %492 = vmatprep.subr.mxu0 0.0
        %493 = vmatpush1.msra.mxu0 0.0
        %494 = vmatprep.subr.mxu0 0.0
        %495 = vmatpush1.msra.mxu0 0.0
        %496 = vmatprep.subr.mxu0 0.0
        %497 = vmatpush1.msra.mxu0 0.0
        %498 = vmatprep.subr.mxu0 0.0
        %499 = vmatpush1.msra.mxu0 0.0
        %500 = vmatprep.subr.mxu0 0.0
        %501 = vmatpush1.msra.mxu0 0.0
        %502 = vmatprep.subr.mxu0 0.0
        %503 = vmatpush1.msra.mxu0 0.0
        %504 = vmatprep.subr.mxu0 0.0
        %505 = vmatpush1.msra.mxu0 0.0
        %506 = vmatprep.subr.mxu0 0.0
        %507 = vmatpush1.msra.mxu0 0.0
        %508 = vmatprep.subr.mxu0 0.0
        %509 = vmatpush1.msra.mxu0 0.0
        %510 = vmatprep.subr.mxu0 0.0
        %511 = vmatpush1.msra.mxu0 0.0
        %512 = vmatprep.subr.mxu0 0.0
        %513 = vmatpush1.msra.mxu0 0.0
        %514 = vmatprep.subr.mxu0 0.0
        %515 = vmatpush1.msra.mxu0 0.0
        %516 = vmatprep.subr.mxu0 0.0
        %517 = vmatpush1.msra.mxu0 0.0
        %518 = vmatprep.subr.mxu0 0.0
        %519 = vmatpush1.msra.mxu0 0.0
        %520 = vmatprep.subr.mxu0 0.0
        %521 = vmatpush1.msra.mxu0 0.0
        %522 = vmatprep.subr.mxu0 0.0
        %523 = vmatpush1.msra.mxu0 0.0
        %524 = vmatprep.subr.mxu0 0.0
        %525 = vmatpush1.msra.mxu0 0.0
        %526 = vmatprep.subr.mxu0 0.0
        %527 = vmatpush1.msra.mxu0 0.0
        %528 = vmatprep.subr.mxu0 0.0
        %529 = vmatpush1.msra.mxu0 0.0
        %530 = vmatprep.subr.mxu0 0.0
        %531 = vmatpush1.msra.mxu0 0.0
        %532 = vmatprep.subr.mxu0 0.0
        %533 = vmatpush1.msra.mxu0 0.0
        %534 = vmatprep.subr.mxu0 0.0
        %535 = vmatpush1.msra.mxu0 0.0
        %536 = vmatprep.subr.mxu0 0.0
        %537 = vmatpush1.msra.mxu0 0.0
        %538 = vmatprep.subr.mxu0 0.0
        %539 = vmatpush1.msra.mxu0 0.0
        %540 = vmatprep.subr.mxu0 0.0
        %541 = vmatpush1.msra.mxu0 0.0
        %542 = vmatprep.subr.mxu0 0.0
        %543 = vmatpush1.msra.mxu0 0.0
        %544 = vmatprep.subr.mxu0 0.0
        %545 = vmatpush1.msra.mxu0 0.0
        %546 = vmatprep.mubr.f32.mxu0 0.0
        %547 = vmatmul.mubr.f32.gmra.mrb[0].mxu0 %v409
        %v548 = vpop.f32.mrb[0].mxu0
        %v549 = vadd.f32 %v405, %v548
        %v550 = vpop.f32.mrb[0].mxu0
        %551 = vdwg.mxu0
        %s552 = scalar_lea.vmem [#allocation5], 16
        %v553 = vld [vmem:[%s552] sm:$0xff]
        %554 = vrot.lane.b32.xlu0 %v242, 126
        %v555 = vpop.permute.xlu0 %554
        %556 = vrot.lane.b32.xlu0 %v243, 126
        %v557 = vpop.permute.xlu0 %556
        %558 = vrot.lane.b32.xlu0 %v244, 126
        %v559 = vpop.permute.xlu0 %558
        %vm560 = vcmask 1031168
        %v561 = vsel %vm560, %v555, %v557
        %v562 = vsel %vm560, %v557, %v559
        %v567 = vsel %vm263, %v553, 0
        %569 = vmatprep.subr.mxu0 %v562
        %570 = vmatpush1.msra.mxu0 %v561
        %571 = vmatprep.subr.mxu0 0.0
        %572 = vmatpush1.msra.mxu0 0.0
        %573 = vmatprep.subr.mxu0 0.0
        %574 = vmatpush1.msra.mxu0 0.0
        %575 = vmatprep.subr.mxu0 0.0
        %576 = vmatpush1.msra.mxu0 0.0
        %577 = vmatprep.subr.mxu0 0.0
        %578 = vmatpush1.msra.mxu0 0.0
        %579 = vmatprep.subr.mxu0 0.0
        %580 = vmatpush1.msra.mxu0 0.0
        %581 = vmatprep.subr.mxu0 0.0
        %582 = vmatpush1.msra.mxu0 0.0
        %583 = vmatprep.subr.mxu0 0.0
        %584 = vmatpush1.msra.mxu0 0.0
        %585 = vmatprep.subr.mxu0 0.0
        %586 = vmatpush1.msra.mxu0 0.0
        %587 = vmatprep.subr.mxu0 0.0
        %588 = vmatpush1.msra.mxu0 0.0
        %589 = vmatprep.subr.mxu0 0.0
        %590 = vmatpush1.msra.mxu0 0.0
        %591 = vmatprep.subr.mxu0 0.0
        %592 = vmatpush1.msra.mxu0 0.0
        %593 = vmatprep.subr.mxu0 0.0
        %594 = vmatpush1.msra.mxu0 0.0
        %595 = vmatprep.subr.mxu0 0.0
        %596 = vmatpush1.msra.mxu0 0.0
        %597 = vmatprep.subr.mxu0 0.0
        %598 = vmatpush1.msra.mxu0 0.0
        %599 = vmatprep.subr.mxu0 0.0
        %600 = vmatpush1.msra.mxu0 0.0
        %601 = vmatprep.subr.mxu0 0.0
        %602 = vmatpush1.msra.mxu0 0.0
        %603 = vmatprep.subr.mxu0 0.0
        %604 = vmatpush1.msra.mxu0 0.0
        %605 = vmatprep.subr.mxu0 0.0
        %606 = vmatpush1.msra.mxu0 0.0
        %607 = vmatprep.subr.mxu0 0.0
        %608 = vmatpush1.msra.mxu0 0.0
        %609 = vmatprep.subr.mxu0 0.0
        %610 = vmatpush1.msra.mxu0 0.0
        %611 = vmatprep.subr.mxu0 0.0
        %612 = vmatpush1.msra.mxu0 0.0
        %613 = vmatprep.subr.mxu0 0.0
        %614 = vmatpush1.msra.mxu0 0.0
        %615 = vmatprep.subr.mxu0 0.0
        %616 = vmatpush1.msra.mxu0 0.0
        %617 = vmatprep.subr.mxu0 0.0
        %618 = vmatpush1.msra.mxu0 0.0
        %619 = vmatprep.subr.mxu0 0.0
        %620 = vmatpush1.msra.mxu0 0.0
        %621 = vmatprep.subr.mxu0 0.0
        %622 = vmatpush1.msra.mxu0 0.0
        %623 = vmatprep.subr.mxu0 0.0
        %624 = vmatpush1.msra.mxu0 0.0
        %625 = vmatprep.subr.mxu0 0.0
        %626 = vmatpush1.msra.mxu0 0.0
        %627 = vmatprep.subr.mxu0 0.0
        %628 = vmatpush1.msra.mxu0 0.0
        %629 = vmatprep.subr.mxu0 0.0
        %630 = vmatpush1.msra.mxu0 0.0
        %631 = vmatprep.subr.mxu0 0.0
        %632 = vmatpush1.msra.mxu0 0.0
        %633 = vmatprep.mubr.f32.mxu0 0.0
        %634 = vmatmul.mubr.f32.gmra.mrb[0].mxu0 %v567
        %v635 = vpop.f32.mrb[0].mxu0
        %v636 = vadd.f32 0.0, %v635
        %v637 = vpop.f32.mrb[0].mxu0
        %v638 = vadd.f32 0.0, %v637
        %639 = vdwg.mxu0
        %640 = vmatprep.subr.mxu0 0.0
        %641 = vmatpush1.msra.mxu0 %v559
        %642 = vmatprep.subr.mxu0 0.0
        %643 = vmatpush1.msra.mxu0 0.0
        %644 = vmatprep.subr.mxu0 0.0
        %645 = vmatpush1.msra.mxu0 0.0
        %646 = vmatprep.subr.mxu0 0.0
        %647 = vmatpush1.msra.mxu0 0.0
        %648 = vmatprep.subr.mxu0 0.0
        %649 = vmatpush1.msra.mxu0 0.0
        %650 = vmatprep.subr.mxu0 0.0
        %651 = vmatpush1.msra.mxu0 0.0
        %652 = vmatprep.subr.mxu0 0.0
        %653 = vmatpush1.msra.mxu0 0.0
        %654 = vmatprep.subr.mxu0 0.0
        %655 = vmatpush1.msra.mxu0 0.0
        %656 = vmatprep.subr.mxu0 0.0
        %657 = vmatpush1.msra.mxu0 0.0
        %658 = vmatprep.subr.mxu0 0.0
        %659 = vmatpush1.msra.mxu0 0.0
        %660 = vmatprep.subr.mxu0 0.0
        %661 = vmatpush1.msra.mxu0 0.0
        %662 = vmatprep.subr.mxu0 0.0
        %663 = vmatpush1.msra.mxu0 0.0
        %664 = vmatprep.subr.mxu0 0.0
        %665 = vmatpush1.msra.mxu0 0.0
        %666 = vmatprep.subr.mxu0 0.0
        %667 = vmatpush1.msra.mxu0 0.0
        %668 = vmatprep.subr.mxu0 0.0
        %669 = vmatpush1.msra.mxu0 0.0
        %670 = vmatprep.subr.mxu0 0.0
        %671 = vmatpush1.msra.mxu0 0.0
        %672 = vmatprep.subr.mxu0 0.0
        %673 = vmatpush1.msra.mxu0 0.0
        %674 = vmatprep.subr.mxu0 0.0
        %675 = vmatpush1.msra.mxu0 0.0
        %676 = vmatprep.subr.mxu0 0.0
        %677 = vmatpush1.msra.mxu0 0.0
        %678 = vmatprep.subr.mxu0 0.0
        %679 = vmatpush1.msra.mxu0 0.0
        %680 = vmatprep.subr.mxu0 0.0
        %681 = vmatpush1.msra.mxu0 0.0
        %682 = vmatprep.subr.mxu0 0.0
        %683 = vmatpush1.msra.mxu0 0.0
        %684 = vmatprep.subr.mxu0 0.0
        %685 = vmatpush1.msra.mxu0 0.0
        %686 = vmatprep.subr.mxu0 0.0
        %687 = vmatpush1.msra.mxu0 0.0
        %688 = vmatprep.subr.mxu0 0.0
        %689 = vmatpush1.msra.mxu0 0.0
        %690 = vmatprep.subr.mxu0 0.0
        %691 = vmatpush1.msra.mxu0 0.0
        %692 = vmatprep.subr.mxu0 0.0
        %693 = vmatpush1.msra.mxu0 0.0
        %694 = vmatprep.subr.mxu0 0.0
        %695 = vmatpush1.msra.mxu0 0.0
        %696 = vmatprep.subr.mxu0 0.0
        %697 = vmatpush1.msra.mxu0 0.0
        %698 = vmatprep.subr.mxu0 0.0
        %699 = vmatpush1.msra.mxu0 0.0
        %700 = vmatprep.subr.mxu0 0.0
        %701 = vmatpush1.msra.mxu0 0.0
        %702 = vmatprep.subr.mxu0 0.0
        %703 = vmatpush1.msra.mxu0 0.0
        %704 = vmatprep.mubr.f32.mxu0 0.0
        %705 = vmatmul.mubr.f32.gmra.mrb[0].mxu0 %v567
        %v706 = vpop.f32.mrb[0].mxu0
        %v707 = vadd.f32 0.0, %v706
        %v708 = vpop.f32.mrb[0].mxu0
        %709 = vdwg.mxu0
        %v710 = vadd.f32 %v478, %v636
        %v711 = vadd.f32 %v480, %v638
        %v712 = vadd.f32 %v549, %v707
        %s713 = scalar_lea.vmem [#allocation5], 24
        %v714 = vld [vmem:[%s713] sm:$0xff]
        %715 = vrot.lane.b32.xlu0 %v242, 110
        %v716 = vpop.permute.xlu0 %715
        %717 = vrot.lane.b32.xlu0 %v243, 110
        %v718 = vpop.permute.xlu0 %717
        %719 = vrot.lane.b32.xlu0 %v244, 110
        %v720 = vpop.permute.xlu0 %719
        %vm721 = vcmask 900096
        %v722 = vsel %vm721, %v716, %v718
        %v723 = vsel %vm721, %v718, %v720
        %v728 = vsel %vm263, %v714, 0
        %730 = vmatprep.subr.mxu0 %v723
        %731 = vmatpush1.msra.mxu0 %v722
        %732 = vmatprep.subr.mxu0 0.0
        %733 = vmatpush1.msra.mxu0 0.0
        %734 = vmatprep.subr.mxu0 0.0
        %735 = vmatpush1.msra.mxu0 0.0
        %736 = vmatprep.subr.mxu0 0.0
        %737 = vmatpush1.msra.mxu0 0.0
        %738 = vmatprep.subr.mxu0 0.0
        %739 = vmatpush1.msra.mxu0 0.0
        %740 = vmatprep.subr.mxu0 0.0
        %741 = vmatpush1.msra.mxu0 0.0
        %742 = vmatprep.subr.mxu0 0.0
        %743 = vmatpush1.msra.mxu0 0.0
        %744 = vmatprep.subr.mxu0 0.0
        %745 = vmatpush1.msra.mxu0 0.0
        %746 = vmatprep.subr.mxu0 0.0
        %747 = vmatpush1.msra.mxu0 0.0
        %748 = vmatprep.subr.mxu0 0.0
        %749 = vmatpush1.msra.mxu0 0.0
        %750 = vmatprep.subr.mxu0 0.0
        %751 = vmatpush1.msra.mxu0 0.0
        %752 = vmatprep.subr.mxu0 0.0
        %753 = vmatpush1.msra.mxu0 0.0
        %754 = vmatprep.subr.mxu0 0.0
        %755 = vmatpush1.msra.mxu0 0.0
        %756 = vmatprep.subr.mxu0 0.0
        %757 = vmatpush1.msra.mxu0 0.0
        %758 = vmatprep.subr.mxu0 0.0
        %759 = vmatpush1.msra.mxu0 0.0
        %760 = vmatprep.subr.mxu0 0.0
        %761 = vmatpush1.msra.mxu0 0.0
        %762 = vmatprep.subr.mxu0 0.0
        %763 = vmatpush1.msra.mxu0 0.0
        %764 = vmatprep.subr.mxu0 0.0
        %765 = vmatpush1.msra.mxu0 0.0
        %766 = vmatprep.subr.mxu0 0.0
        %767 = vmatpush1.msra.mxu0 0.0
        %768 = vmatprep.subr.mxu0 0.0
        %769 = vmatpush1.msra.mxu0 0.0
        %770 = vmatprep.subr.mxu0 0.0
        %771 = vmatpush1.msra.mxu0 0.0
        %772 = vmatprep.subr.mxu0 0.0
        %773 = vmatpush1.msra.mxu0 0.0
        %774 = vmatprep.subr.mxu0 0.0
        %775 = vmatpush1.msra.mxu0 0.0
        %776 = vmatprep.subr.mxu0 0.0
        %777 = vmatpush1.msra.mxu0 0.0
        %778 = vmatprep.subr.mxu0 0.0
        %779 = vmatpush1.msra.mxu0 0.0
        %780 = vmatprep.subr.mxu0 0.0
        %781 = vmatpush1.msra.mxu0 0.0
        %782 = vmatprep.subr.mxu0 0.0
        %783 = vmatpush1.msra.mxu0 0.0
        %784 = vmatprep.subr.mxu0 0.0
        %785 = vmatpush1.msra.mxu0 0.0
        %786 = vmatprep.subr.mxu0 0.0
        %787 = vmatpush1.msra.mxu0 0.0
        %788 = vmatprep.subr.mxu0 0.0
        %789 = vmatpush1.msra.mxu0 0.0
        %790 = vmatprep.subr.mxu0 0.0
        %791 = vmatpush1.msra.mxu0 0.0
        %792 = vmatprep.subr.mxu0 0.0
        %793 = vmatpush1.msra.mxu0 0.0
        %794 = vmatprep.mubr.f32.mxu0 0.0
        %795 = vmatmul.mubr.f32.gmra.mrb[0].mxu0 %v728
        %v796 = vpop.f32.mrb[0].mxu0
        %v797 = vadd.f32 0.0, %v796
        %v798 = vpop.f32.mrb[0].mxu0
        %v799 = vadd.f32 0.0, %v798
        %800 = vdwg.mxu0
        %801 = vmatprep.subr.mxu0 0.0
        %802 = vmatpush1.msra.mxu0 %v720
        %803 = vmatprep.subr.mxu0 0.0
        %804 = vmatpush1.msra.mxu0 0.0
        %805 = vmatprep.subr.mxu0 0.0
        %806 = vmatpush1.msra.mxu0 0.0
        %807 = vmatprep.subr.mxu0 0.0
        %808 = vmatpush1.msra.mxu0 0.0
        %809 = vmatprep.subr.mxu0 0.0
        %810 = vmatpush1.msra.mxu0 0.0
        %811 = vmatprep.subr.mxu0 0.0
        %812 = vmatpush1.msra.mxu0 0.0
        %813 = vmatprep.subr.mxu0 0.0
        %814 = vmatpush1.msra.mxu0 0.0
        %815 = vmatprep.subr.mxu0 0.0
        %816 = vmatpush1.msra.mxu0 0.0
        %817 = vmatprep.subr.mxu0 0.0
        %818 = vmatpush1.msra.mxu0 0.0
        %819 = vmatprep.subr.mxu0 0.0
        %820 = vmatpush1.msra.mxu0 0.0
        %821 = vmatprep.subr.mxu0 0.0
        %822 = vmatpush1.msra.mxu0 0.0
        %823 = vmatprep.subr.mxu0 0.0
        %824 = vmatpush1.msra.mxu0 0.0
        %825 = vmatprep.subr.mxu0 0.0
        %826 = vmatpush1.msra.mxu0 0.0
        %827 = vmatprep.subr.mxu0 0.0
        %828 = vmatpush1.msra.mxu0 0.0
        %829 = vmatprep.subr.mxu0 0.0
        %830 = vmatpush1.msra.mxu0 0.0
        %831 = vmatprep.subr.mxu0 0.0
        %832 = vmatpush1.msra.mxu0 0.0
        %833 = vmatprep.subr.mxu0 0.0
        %834 = vmatpush1.msra.mxu0 0.0
        %835 = vmatprep.subr.mxu0 0.0
        %836 = vmatpush1.msra.mxu0 0.0
        %837 = vmatprep.subr.mxu0 0.0
        %838 = vmatpush1.msra.mxu0 0.0
        %839 = vmatprep.subr.mxu0 0.0
        %840 = vmatpush1.msra.mxu0 0.0
        %841 = vmatprep.subr.mxu0 0.0
        %842 = vmatpush1.msra.mxu0 0.0
        %843 = vmatprep.subr.mxu0 0.0
        %844 = vmatpush1.msra.mxu0 0.0
        %845 = vmatprep.subr.mxu0 0.0
        %846 = vmatpush1.msra.mxu0 0.0
        %847 = vmatprep.subr.mxu0 0.0
        %848 = vmatpush1.msra.mxu0 0.0
        %849 = vmatprep.subr.mxu0 0.0
        %850 = vmatpush1.msra.mxu0 0.0
        %851 = vmatprep.subr.mxu0 0.0
        %852 = vmatpush1.msra.mxu0 0.0
        %853 = vmatprep.subr.mxu0 0.0
        %854 = vmatpush1.msra.mxu0 0.0
        %855 = vmatprep.subr.mxu0 0.0
        %856 = vmatpush1.msra.mxu0 0.0
        %857 = vmatprep.subr.mxu0 0.0
        %858 = vmatpush1.msra.mxu0 0.0
        %859 = vmatprep.subr.mxu0 0.0
        %860 = vmatpush1.msra.mxu0 0.0
        %861 = vmatprep.subr.mxu0 0.0
        %862 = vmatpush1.msra.mxu0 0.0
        %863 = vmatprep.subr.mxu0 0.0
        %864 = vmatpush1.msra.mxu0 0.0
        %865 = vmatprep.mubr.f32.mxu0 0.0
        %866 = vmatmul.mubr.f32.gmra.mrb[0].mxu0 %v728
        %v867 = vpop.f32.mrb[0].mxu0
        %v868 = vadd.f32 0.0, %v867
        %v869 = vpop.f32.mrb[0].mxu0
        %870 = vdwg.mxu0
        %v871 = vadd.f32 %v710, %v797
        %v872 = vadd.f32 %v711, %v799
        %v873 = vadd.f32 %v712, %v868
        %s874 = scalar_lea.vmem [#allocation5], 32
        %v875 = vld [vmem:[%s874] sm:$0xff]
        %876 = vrot.lane.b32.xlu0 %v242, 109
        %v877 = vpop.permute.xlu0 %876
        %878 = vrot.lane.b32.xlu0 %v243, 109
        %v879 = vpop.permute.xlu0 %878
        %880 = vrot.lane.b32.xlu0 %v244, 109
        %v881 = vpop.permute.xlu0 %880
        %vm882 = vcmask 891904
        %v883 = vsel %vm882, %v877, %v879
        %v884 = vsel %vm882, %v879, %v881
        %v889 = vsel %vm263, %v875, 0
        %891 = vmatprep.subr.mxu0 %v884
        %892 = vmatpush1.msra.mxu0 %v883
        %893 = vmatprep.subr.mxu0 0.0
        %894 = vmatpush1.msra.mxu0 0.0
        %895 = vmatprep.subr.mxu0 0.0
        %896 = vmatpush1.msra.mxu0 0.0
        %897 = vmatprep.subr.mxu0 0.0
        %898 = vmatpush1.msra.mxu0 0.0
        %899 = vmatprep.subr.mxu0 0.0
        %900 = vmatpush1.msra.mxu0 0.0
        %901 = vmatprep.subr.mxu0 0.0
        %902 = vmatpush1.msra.mxu0 0.0
        %903 = vmatprep.subr.mxu0 0.0
        %904 = vmatpush1.msra.mxu0 0.0
        %905 = vmatprep.subr.mxu0 0.0
        %906 = vmatpush1.msra.mxu0 0.0
        %907 = vmatprep.subr.mxu0 0.0
        %908 = vmatpush1.msra.mxu0 0.0
        %909 = vmatprep.subr.mxu0 0.0
        %910 = vmatpush1.msra.mxu0 0.0
        %911 = vmatprep.subr.mxu0 0.0
        %912 = vmatpush1.msra.mxu0 0.0
        %913 = vmatprep.subr.mxu0 0.0
        %914 = vmatpush1.msra.mxu0 0.0
        %915 = vmatprep.subr.mxu0 0.0
        %916 = vmatpush1.msra.mxu0 0.0
        %917 = vmatprep.subr.mxu0 0.0
        %918 = vmatpush1.msra.mxu0 0.0
        %919 = vmatprep.subr.mxu0 0.0
        %920 = vmatpush1.msra.mxu0 0.0
        %921 = vmatprep.subr.mxu0 0.0
        %922 = vmatpush1.msra.mxu0 0.0
        %923 = vmatprep.subr.mxu0 0.0
        %924 = vmatpush1.msra.mxu0 0.0
        %925 = vmatprep.subr.mxu0 0.0
        %926 = vmatpush1.msra.mxu0 0.0
        %927 = vmatprep.subr.mxu0 0.0
        %928 = vmatpush1.msra.mxu0 0.0
        %929 = vmatprep.subr.mxu0 0.0
        %930 = vmatpush1.msra.mxu0 0.0
        %931 = vmatprep.subr.mxu0 0.0
        %932 = vmatpush1.msra.mxu0 0.0
        %933 = vmatprep.subr.mxu0 0.0
        %934 = vmatpush1.msra.mxu0 0.0
        %935 = vmatprep.subr.mxu0 0.0
        %936 = vmatpush1.msra.mxu0 0.0
        %937 = vmatprep.subr.mxu0 0.0
        %938 = vmatpush1.msra.mxu0 0.0
        %939 = vmatprep.subr.mxu0 0.0
        %940 = vmatpush1.msra.mxu0 0.0
        %941 = vmatprep.subr.mxu0 0.0
        %942 = vmatpush1.msra.mxu0 0.0
        %943 = vmatprep.subr.mxu0 0.0
        %944 = vmatpush1.msra.mxu0 0.0
        %945 = vmatprep.subr.mxu0 0.0
        %946 = vmatpush1.msra.mxu0 0.0
        %947 = vmatprep.subr.mxu0 0.0
        %948 = vmatpush1.msra.mxu0 0.0
        %949 = vmatprep.subr.mxu0 0.0
        %950 = vmatpush1.msra.mxu0 0.0
        %951 = vmatprep.subr.mxu0 0.0
        %952 = vmatpush1.msra.mxu0 0.0
        %953 = vmatprep.subr.mxu0 0.0
        %954 = vmatpush1.msra.mxu0 0.0
        %955 = vmatprep.mubr.f32.mxu0 0.0
        %956 = vmatmul.mubr.f32.gmra.mrb[0].mxu0 %v889
        %v957 = vpop.f32.mrb[0].mxu0
        %v958 = vadd.f32 0.0, %v957
        %v959 = vpop.f32.mrb[0].mxu0
        %v960 = vadd.f32 0.0, %v959
        %961 = vdwg.mxu0
        %962 = vmatprep.subr.mxu0 0.0
        %963 = vmatpush1.msra.mxu0 %v881
        %964 = vmatprep.subr.mxu0 0.0
        %965 = vmatpush1.msra.mxu0 0.0
        %966 = vmatprep.subr.mxu0 0.0
        %967 = vmatpush1.msra.mxu0 0.0
        %968 = vmatprep.subr.mxu0 0.0
        %969 = vmatpush1.msra.mxu0 0.0
        %970 = vmatprep.subr.mxu0 0.0
        %971 = vmatpush1.msra.mxu0 0.0
        %972 = vmatprep.subr.mxu0 0.0
        %973 = vmatpush1.msra.mxu0 0.0
        %974 = vmatprep.subr.mxu0 0.0
        %975 = vmatpush1.msra.mxu0 0.0
        %976 = vmatprep.subr.mxu0 0.0
        %977 = vmatpush1.msra.mxu0 0.0
        %978 = vmatprep.subr.mxu0 0.0
        %979 = vmatpush1.msra.mxu0 0.0
        %980 = vmatprep.subr.mxu0 0.0
        %981 = vmatpush1.msra.mxu0 0.0
        %982 = vmatprep.subr.mxu0 0.0
        %983 = vmatpush1.msra.mxu0 0.0
        %984 = vmatprep.subr.mxu0 0.0
        %985 = vmatpush1.msra.mxu0 0.0
        %986 = vmatprep.subr.mxu0 0.0
        %987 = vmatpush1.msra.mxu0 0.0
        %988 = vmatprep.subr.mxu0 0.0
        %989 = vmatpush1.msra.mxu0 0.0
        %990 = vmatprep.subr.mxu0 0.0
        %991 = vmatpush1.msra.mxu0 0.0
        %992 = vmatprep.subr.mxu0 0.0
        %993 = vmatpush1.msra.mxu0 0.0
        %994 = vmatprep.subr.mxu0 0.0
        %995 = vmatpush1.msra.mxu0 0.0
        %996 = vmatprep.subr.mxu0 0.0
        %997 = vmatpush1.msra.mxu0 0.0
        %998 = vmatprep.subr.mxu0 0.0
        %999 = vmatpush1.msra.mxu0 0.0
        %1000 = vmatprep.subr.mxu0 0.0
        %1001 = vmatpush1.msra.mxu0 0.0
        %1002 = vmatprep.subr.mxu0 0.0
        %1003 = vmatpush1.msra.mxu0 0.0
        %1004 = vmatprep.subr.mxu0 0.0
        %1005 = vmatpush1.msra.mxu0 0.0
        %1006 = vmatprep.subr.mxu0 0.0
        %1007 = vmatpush1.msra.mxu0 0.0
        %1008 = vmatprep.subr.mxu0 0.0
        %1009 = vmatpush1.msra.mxu0 0.0
        %1010 = vmatprep.subr.mxu0 0.0
        %1011 = vmatpush1.msra.mxu0 0.0
        %1012 = vmatprep.subr.mxu0 0.0
        %1013 = vmatpush1.msra.mxu0 0.0
        %1014 = vmatprep.subr.mxu0 0.0
        %1015 = vmatpush1.msra.mxu0 0.0
        %1016 = vmatprep.subr.mxu0 0.0
        %1017 = vmatpush1.msra.mxu0 0.0
        %1018 = vmatprep.subr.mxu0 0.0
        %1019 = vmatpush1.msra.mxu0 0.0
        %1020 = vmatprep.subr.mxu0 0.0
        %1021 = vmatpush1.msra.mxu0 0.0
        %1022 = vmatprep.subr.mxu0 0.0
        %1023 = vmatpush1.msra.mxu0 0.0
        %1024 = vmatprep.subr.mxu0 0.0
        %1025 = vmatpush1.msra.mxu0 0.0
        %1026 = vmatprep.mubr.f32.mxu0 0.0
        %1027 = vmatmul.mubr.f32.gmra.mrb[0].mxu0 %v889
        %v1028 = vpop.f32.mrb[0].mxu0
        %v1029 = vadd.f32 0.0, %v1028
        %v1030 = vpop.f32.mrb[0].mxu0
        %1031 = vdwg.mxu0
        %v1032 = vadd.f32 %v871, %v958
        %v1033 = vadd.f32 %v872, %v960
        %v1034 = vadd.f32 %v873, %v1029
        %s1035 = scalar_lea.vmem [#allocation5], 40
        %v1036 = vld [vmem:[%s1035] sm:$0xff]
        %1037 = vrot.lane.b32.xlu0 %v242, 108
        %v1038 = vpop.permute.xlu0 %1037
        %1039 = vrot.lane.b32.xlu0 %v243, 108
        %v1040 = vpop.permute.xlu0 %1039
        %1041 = vrot.lane.b32.xlu0 %v244, 108
        %v1042 = vpop.permute.xlu0 %1041
        %vm1043 = vcmask 883712
        %v1044 = vsel %vm1043, %v1038, %v1040
        %v1045 = vsel %vm1043, %v1040, %v1042
        %v1050 = vsel %vm263, %v1036, 0
        %1052 = vmatprep.subr.mxu0 %v1045
        %1053 = vmatpush1.msra.mxu0 %v1044
        %1054 = vmatprep.subr.mxu0 0.0
        %1055 = vmatpush1.msra.mxu0 0.0
        %1056 = vmatprep.subr.mxu0 0.0
        %1057 = vmatpush1.msra.mxu0 0.0
        %1058 = vmatprep.subr.mxu0 0.0
        %1059 = vmatpush1.msra.mxu0 0.0
        %1060 = vmatprep.subr.mxu0 0.0
        %1061 = vmatpush1.msra.mxu0 0.0
        %1062 = vmatprep.subr.mxu0 0.0
        %1063 = vmatpush1.msra.mxu0 0.0
        %1064 = vmatprep.subr.mxu0 0.0
        %1065 = vmatpush1.msra.mxu0 0.0
        %1066 = vmatprep.subr.mxu0 0.0
        %1067 = vmatpush1.msra.mxu0 0.0
        %1068 = vmatprep.subr.mxu0 0.0
        %1069 = vmatpush1.msra.mxu0 0.0
        %1070 = vmatprep.subr.mxu0 0.0
        %1071 = vmatpush1.msra.mxu0 0.0
        %1072 = vmatprep.subr.mxu0 0.0
        %1073 = vmatpush1.msra.mxu0 0.0
        %1074 = vmatprep.subr.mxu0 0.0
        %1075 = vmatpush1.msra.mxu0 0.0
        %1076 = vmatprep.subr.mxu0 0.0
        %1077 = vmatpush1.msra.mxu0 0.0
        %1078 = vmatprep.subr.mxu0 0.0
        %1079 = vmatpush1.msra.mxu0 0.0
        %1080 = vmatprep.subr.mxu0 0.0
        %1081 = vmatpush1.msra.mxu0 0.0
        %1082 = vmatprep.subr.mxu0 0.0
        %1083 = vmatpush1.msra.mxu0 0.0
        %1084 = vmatprep.subr.mxu0 0.0
        %1085 = vmatpush1.msra.mxu0 0.0
        %1086 = vmatprep.subr.mxu0 0.0
        %1087 = vmatpush1.msra.mxu0 0.0
        %1088 = vmatprep.subr.mxu0 0.0
        %1089 = vmatpush1.msra.mxu0 0.0
        %1090 = vmatprep.subr.mxu0 0.0
        %1091 = vmatpush1.msra.mxu0 0.0
        %1092 = vmatprep.subr.mxu0 0.0
        %1093 = vmatpush1.msra.mxu0 0.0
        %1094 = vmatprep.subr.mxu0 0.0
        %1095 = vmatpush1.msra.mxu0 0.0
        %1096 = vmatprep.subr.mxu0 0.0
        %1097 = vmatpush1.msra.mxu0 0.0
        %1098 = vmatprep.subr.mxu0 0.0
        %1099 = vmatpush1.msra.mxu0 0.0
        %1100 = vmatprep.subr.mxu0 0.0
        %1101 = vmatpush1.msra.mxu0 0.0
        %1102 = vmatprep.subr.mxu0 0.0
        %1103 = vmatpush1.msra.mxu0 0.0
        %1104 = vmatprep.subr.mxu0 0.0
        %1105 = vmatpush1.msra.mxu0 0.0
        %1106 = vmatprep.subr.mxu0 0.0
        %1107 = vmatpush1.msra.mxu0 0.0
        %1108 = vmatprep.subr.mxu0 0.0
        %1109 = vmatpush1.msra.mxu0 0.0
        %1110 = vmatprep.subr.mxu0 0.0
        %1111 = vmatpush1.msra.mxu0 0.0
        %1112 = vmatprep.subr.mxu0 0.0
        %1113 = vmatpush1.msra.mxu0 0.0
        %1114 = vmatprep.subr.mxu0 0.0
        %1115 = vmatpush1.msra.mxu0 0.0
        %1116 = vmatprep.mubr.f32.mxu0 0.0
        %1117 = vmatmul.mubr.f32.gmra.mrb[0].mxu0 %v1050
        %v1118 = vpop.f32.mrb[0].mxu0
        %v1119 = vadd.f32 0.0, %v1118
        %v1120 = vpop.f32.mrb[0].mxu0
        %v1121 = vadd.f32 0.0, %v1120
        %1122 = vdwg.mxu0
        %1123 = vmatprep.subr.mxu0 0.0
        %1124 = vmatpush1.msra.mxu0 %v1042
        %1125 = vmatprep.subr.mxu0 0.0
        %1126 = vmatpush1.msra.mxu0 0.0
        %1127 = vmatprep.subr.mxu0 0.0
        %1128 = vmatpush1.msra.mxu0 0.0
        %1129 = vmatprep.subr.mxu0 0.0
        %1130 = vmatpush1.msra.mxu0 0.0
        %1131 = vmatprep.subr.mxu0 0.0
        %1132 = vmatpush1.msra.mxu0 0.0
        %1133 = vmatprep.subr.mxu0 0.0
        %1134 = vmatpush1.msra.mxu0 0.0
        %1135 = vmatprep.subr.mxu0 0.0
        %1136 = vmatpush1.msra.mxu0 0.0
        %1137 = vmatprep.subr.mxu0 0.0
        %1138 = vmatpush1.msra.mxu0 0.0
        %1139 = vmatprep.subr.mxu0 0.0
        %1140 = vmatpush1.msra.mxu0 0.0
        %1141 = vmatprep.subr.mxu0 0.0
        %1142 = vmatpush1.msra.mxu0 0.0
        %1143 = vmatprep.subr.mxu0 0.0
        %1144 = vmatpush1.msra.mxu0 0.0
        %1145 = vmatprep.subr.mxu0 0.0
        %1146 = vmatpush1.msra.mxu0 0.0
        %1147 = vmatprep.subr.mxu0 0.0
        %1148 = vmatpush1.msra.mxu0 0.0
        %1149 = vmatprep.subr.mxu0 0.0
        %1150 = vmatpush1.msra.mxu0 0.0
        %1151 = vmatprep.subr.mxu0 0.0
        %1152 = vmatpush1.msra.mxu0 0.0
        %1153 = vmatprep.subr.mxu0 0.0
        %1154 = vmatpush1.msra.mxu0 0.0
        %1155 = vmatprep.subr.mxu0 0.0
        %1156 = vmatpush1.msra.mxu0 0.0
        %1157 = vmatprep.subr.mxu0 0.0
        %1158 = vmatpush1.msra.mxu0 0.0
        %1159 = vmatprep.subr.mxu0 0.0
        %1160 = vmatpush1.msra.mxu0 0.0
        %1161 = vmatprep.subr.mxu0 0.0
        %1162 = vmatpush1.msra.mxu0 0.0
        %1163 = vmatprep.subr.mxu0 0.0
        %1164 = vmatpush1.msra.mxu0 0.0
        %1165 = vmatprep.subr.mxu0 0.0
        %1166 = vmatpush1.msra.mxu0 0.0
        %1167 = vmatprep.subr.mxu0 0.0
        %1168 = vmatpush1.msra.mxu0 0.0
        %1169 = vmatprep.subr.mxu0 0.0
        %1170 = vmatpush1.msra.mxu0 0.0
        %1171 = vmatprep.subr.mxu0 0.0
        %1172 = vmatpush1.msra.mxu0 0.0
        %1173 = vmatprep.subr.mxu0 0.0
        %1174 = vmatpush1.msra.mxu0 0.0
        %1175 = vmatprep.subr.mxu0 0.0
        %1176 = vmatpush1.msra.mxu0 0.0
        %1177 = vmatprep.subr.mxu0 0.0
        %1178 = vmatpush1.msra.mxu0 0.0
        %1179 = vmatprep.subr.mxu0 0.0
        %1180 = vmatpush1.msra.mxu0 0.0
        %1181 = vmatprep.subr.mxu0 0.0
        %1182 = vmatpush1.msra.mxu0 0.0
        %1183 = vmatprep.subr.mxu0 0.0
        %1184 = vmatpush1.msra.mxu0 0.0
        %1185 = vmatprep.subr.mxu0 0.0
        %1186 = vmatpush1.msra.mxu0 0.0
        %1187 = vmatprep.mubr.f32.mxu0 0.0
        %1188 = vmatmul.mubr.f32.gmra.mrb[0].mxu0 %v1050
        %v1189 = vpop.f32.mrb[0].mxu0
        %v1190 = vadd.f32 0.0, %v1189
        %v1191 = vpop.f32.mrb[0].mxu0
        %1192 = vdwg.mxu0
        %v1193 = vadd.f32 %v1032, %v1119
        %v1194 = vadd.f32 %v1033, %v1121
        %v1195 = vadd.f32 %v1034, %v1190
        %s1196 = scalar_lea.vmem [#allocation5], 48
        %v1197 = vld [vmem:[%s1196] sm:$0xff]
        %1198 = vrot.lane.b32.xlu0 %v242, 92
        %v1199 = vpop.permute.xlu0 %1198
        %1200 = vrot.lane.b32.xlu0 %v243, 92
        %v1201 = vpop.permute.xlu0 %1200
        %1202 = vrot.lane.b32.xlu0 %v244, 92
        %v1203 = vpop.permute.xlu0 %1202
        %vm1204 = vcmask 752640
        %v1205 = vsel %vm1204, %v1199, %v1201
        %v1206 = vsel %vm1204, %v1201, %v1203
        %v1211 = vsel %vm263, %v1197, 0
        %1213 = vmatprep.subr.mxu0 %v1206
        %1214 = vmatpush1.msra.mxu0 %v1205
        %1215 = vmatprep.subr.mxu0 0.0
        %1216 = vmatpush1.msra.mxu0 0.0
        %1217 = vmatprep.subr.mxu0 0.0
        %1218 = vmatpush1.msra.mxu0 0.0
        %1219 = vmatprep.subr.mxu0 0.0
        %1220 = vmatpush1.msra.mxu0 0.0
        %1221 = vmatprep.subr.mxu0 0.0
        %1222 = vmatpush1.msra.mxu0 0.0
        %1223 = vmatprep.subr.mxu0 0.0
        %1224 = vmatpush1.msra.mxu0 0.0
        %1225 = vmatprep.subr.mxu0 0.0
        %1226 = vmatpush1.msra.mxu0 0.0
        %1227 = vmatprep.subr.mxu0 0.0
        %1228 = vmatpush1.msra.mxu0 0.0
        %1229 = vmatprep.subr.mxu0 0.0
        %1230 = vmatpush1.msra.mxu0 0.0
        %1231 = vmatprep.subr.mxu0 0.0
        %1232 = vmatpush1.msra.mxu0 0.0
        %1233 = vmatprep.subr.mxu0 0.0
        %1234 = vmatpush1.msra.mxu0 0.0
        %1235 = vmatprep.subr.mxu0 0.0
        %1236 = vmatpush1.msra.mxu0 0.0
        %1237 = vmatprep.subr.mxu0 0.0
        %1238 = vmatpush1.msra.mxu0 0.0
        %1239 = vmatprep.subr.mxu0 0.0
        %1240 = vmatpush1.msra.mxu0 0.0
        %1241 = vmatprep.subr.mxu0 0.0
        %1242 = vmatpush1.msra.mxu0 0.0
        %1243 = vmatprep.subr.mxu0 0.0
        %1244 = vmatpush1.msra.mxu0 0.0
        %1245 = vmatprep.subr.mxu0 0.0
        %1246 = vmatpush1.msra.mxu0 0.0
        %1247 = vmatprep.subr.mxu0 0.0
        %1248 = vmatpush1.msra.mxu0 0.0
        %1249 = vmatprep.subr.mxu0 0.0
        %1250 = vmatpush1.msra.mxu0 0.0
        %1251 = vmatprep.subr.mxu0 0.0
        %1252 = vmatpush1.msra.mxu0 0.0
        %1253 = vmatprep.subr.mxu0 0.0
        %1254 = vmatpush1.msra.mxu0 0.0
        %1255 = vmatprep.subr.mxu0 0.0
        %1256 = vmatpush1.msra.mxu0 0.0
        %1257 = vmatprep.subr.mxu0 0.0
        %1258 = vmatpush1.msra.mxu0 0.0
        %1259 = vmatprep.subr.mxu0 0.0
        %1260 = vmatpush1.msra.mxu0 0.0
        %1261 = vmatprep.subr.mxu0 0.0
        %1262 = vmatpush1.msra.mxu0 0.0
        %1263 = vmatprep.subr.mxu0 0.0
        %1264 = vmatpush1.msra.mxu0 0.0
        %1265 = vmatprep.subr.mxu0 0.0
        %1266 = vmatpush1.msra.mxu0 0.0
        %1267 = vmatprep.subr.mxu0 0.0
        %1268 = vmatpush1.msra.mxu0 0.0
        %1269 = vmatprep.subr.mxu0 0.0
        %1270 = vmatpush1.msra.mxu0 0.0
        %1271 = vmatprep.subr.mxu0 0.0
        %1272 = vmatpush1.msra.mxu0 0.0
        %1273 = vmatprep.subr.mxu0 0.0
        %1274 = vmatpush1.msra.mxu0 0.0
        %1275 = vmatprep.subr.mxu0 0.0
        %1276 = vmatpush1.msra.mxu0 0.0
        %1277 = vmatprep.mubr.f32.mxu0 0.0
        %1278 = vmatmul.mubr.f32.gmra.mrb[0].mxu0 %v1211
        %v1279 = vpop.f32.mrb[0].mxu0
        %v1280 = vadd.f32 0.0, %v1279
        %v1281 = vpop.f32.mrb[0].mxu0
        %v1282 = vadd.f32 0.0, %v1281
        %1283 = vdwg.mxu0
        %1284 = vmatprep.subr.mxu0 0.0
        %1285 = vmatpush1.msra.mxu0 %v1203
        %1286 = vmatprep.subr.mxu0 0.0
        %1287 = vmatpush1.msra.mxu0 0.0
        %1288 = vmatprep.subr.mxu0 0.0
        %1289 = vmatpush1.msra.mxu0 0.0
        %1290 = vmatprep.subr.mxu0 0.0
        %1291 = vmatpush1.msra.mxu0 0.0
        %1292 = vmatprep.subr.mxu0 0.0
        %1293 = vmatpush1.msra.mxu0 0.0
        %1294 = vmatprep.subr.mxu0 0.0
        %1295 = vmatpush1.msra.mxu0 0.0
        %1296 = vmatprep.subr.mxu0 0.0
        %1297 = vmatpush1.msra.mxu0 0.0
        %1298 = vmatprep.subr.mxu0 0.0
        %1299 = vmatpush1.msra.mxu0 0.0
        %1300 = vmatprep.subr.mxu0 0.0
        %1301 = vmatpush1.msra.mxu0 0.0
        %1302 = vmatprep.subr.mxu0 0.0
        %1303 = vmatpush1.msra.mxu0 0.0
        %1304 = vmatprep.subr.mxu0 0.0
        %1305 = vmatpush1.msra.mxu0 0.0
        %1306 = vmatprep.subr.mxu0 0.0
        %1307 = vmatpush1.msra.mxu0 0.0
        %1308 = vmatprep.subr.mxu0 0.0
        %1309 = vmatpush1.msra.mxu0 0.0
        %1310 = vmatprep.subr.mxu0 0.0
        %1311 = vmatpush1.msra.mxu0 0.0
        %1312 = vmatprep.subr.mxu0 0.0
        %1313 = vmatpush1.msra.mxu0 0.0
        %1314 = vmatprep.subr.mxu0 0.0
        %1315 = vmatpush1.msra.mxu0 0.0
        %1316 = vmatprep.subr.mxu0 0.0
        %1317 = vmatpush1.msra.mxu0 0.0
        %1318 = vmatprep.subr.mxu0 0.0
        %1319 = vmatpush1.msra.mxu0 0.0
        %1320 = vmatprep.subr.mxu0 0.0
        %1321 = vmatpush1.msra.mxu0 0.0
        %1322 = vmatprep.subr.mxu0 0.0
        %1323 = vmatpush1.msra.mxu0 0.0
        %1324 = vmatprep.subr.mxu0 0.0
        %1325 = vmatpush1.msra.mxu0 0.0
        %1326 = vmatprep.subr.mxu0 0.0
        %1327 = vmatpush1.msra.mxu0 0.0
        %1328 = vmatprep.subr.mxu0 0.0
        %1329 = vmatpush1.msra.mxu0 0.0
        %1330 = vmatprep.subr.mxu0 0.0
        %1331 = vmatpush1.msra.mxu0 0.0
        %1332 = vmatprep.subr.mxu0 0.0
        %1333 = vmatpush1.msra.mxu0 0.0
        %1334 = vmatprep.subr.mxu0 0.0
        %1335 = vmatpush1.msra.mxu0 0.0
        %1336 = vmatprep.subr.mxu0 0.0
        %1337 = vmatpush1.msra.mxu0 0.0
        %1338 = vmatprep.subr.mxu0 0.0
        %1339 = vmatpush1.msra.mxu0 0.0
        %1340 = vmatprep.subr.mxu0 0.0
        %1341 = vmatpush1.msra.mxu0 0.0
        %1342 = vmatprep.subr.mxu0 0.0
        %1343 = vmatpush1.msra.mxu0 0.0
        %1344 = vmatprep.subr.mxu0 0.0
        %1345 = vmatpush1.msra.mxu0 0.0
        %1346 = vmatprep.subr.mxu0 0.0
        %1347 = vmatpush1.msra.mxu0 0.0
        %1348 = vmatprep.mubr.f32.mxu0 0.0
        %1349 = vmatmul.mubr.f32.gmra.mrb[0].mxu0 %v1211
        %v1350 = vpop.f32.mrb[0].mxu0
        %v1351 = vadd.f32 0.0, %v1350
        %v1352 = vpop.f32.mrb[0].mxu0
        %1353 = vdwg.mxu0
        %v1354 = vadd.f32 %v1193, %v1280
        %v1355 = vadd.f32 %v1194, %v1282
        %v1356 = vadd.f32 %v1195, %v1351
        %s1357 = scalar_lea.vmem [#allocation5], 56
        %v1358 = vld [vmem:[%s1357] sm:$0xff]
        %1359 = vrot.lane.b32.xlu0 %v242, 91
        %v1360 = vpop.permute.xlu0 %1359
        %1361 = vrot.lane.b32.xlu0 %v243, 91
        %v1362 = vpop.permute.xlu0 %1361
        %1363 = vrot.lane.b32.xlu0 %v244, 91
        %v1364 = vpop.permute.xlu0 %1363
        %vm1365 = vcmask 744448
        %v1366 = vsel %vm1365, %v1360, %v1362
        %v1367 = vsel %vm1365, %v1362, %v1364
        %v1372 = vsel %vm263, %v1358, 0
        %1374 = vmatprep.subr.mxu0 %v1367
        %1375 = vmatpush1.msra.mxu0 %v1366
        %1376 = vmatprep.subr.mxu0 0.0
        %1377 = vmatpush1.msra.mxu0 0.0
        %1378 = vmatprep.subr.mxu0 0.0
        %1379 = vmatpush1.msra.mxu0 0.0
        %1380 = vmatprep.subr.mxu0 0.0
        %1381 = vmatpush1.msra.mxu0 0.0
        %1382 = vmatprep.subr.mxu0 0.0
        %1383 = vmatpush1.msra.mxu0 0.0
        %1384 = vmatprep.subr.mxu0 0.0
        %1385 = vmatpush1.msra.mxu0 0.0
        %1386 = vmatprep.subr.mxu0 0.0
        %1387 = vmatpush1.msra.mxu0 0.0
        %1388 = vmatprep.subr.mxu0 0.0
        %1389 = vmatpush1.msra.mxu0 0.0
        %1390 = vmatprep.subr.mxu0 0.0
        %1391 = vmatpush1.msra.mxu0 0.0
        %1392 = vmatprep.subr.mxu0 0.0
        %1393 = vmatpush1.msra.mxu0 0.0
        %1394 = vmatprep.subr.mxu0 0.0
        %1395 = vmatpush1.msra.mxu0 0.0
        %1396 = vmatprep.subr.mxu0 0.0
        %1397 = vmatpush1.msra.mxu0 0.0
        %1398 = vmatprep.subr.mxu0 0.0
        %1399 = vmatpush1.msra.mxu0 0.0
        %1400 = vmatprep.subr.mxu0 0.0
        %1401 = vmatpush1.msra.mxu0 0.0
        %1402 = vmatprep.subr.mxu0 0.0
        %1403 = vmatpush1.msra.mxu0 0.0
        %1404 = vmatprep.subr.mxu0 0.0
        %1405 = vmatpush1.msra.mxu0 0.0
        %1406 = vmatprep.subr.mxu0 0.0
        %1407 = vmatpush1.msra.mxu0 0.0
        %1408 = vmatprep.subr.mxu0 0.0
        %1409 = vmatpush1.msra.mxu0 0.0
        %1410 = vmatprep.subr.mxu0 0.0
        %1411 = vmatpush1.msra.mxu0 0.0
        %1412 = vmatprep.subr.mxu0 0.0
        %1413 = vmatpush1.msra.mxu0 0.0
        %1414 = vmatprep.subr.mxu0 0.0
        %1415 = vmatpush1.msra.mxu0 0.0
        %1416 = vmatprep.subr.mxu0 0.0
        %1417 = vmatpush1.msra.mxu0 0.0
        %1418 = vmatprep.subr.mxu0 0.0
        %1419 = vmatpush1.msra.mxu0 0.0
        %1420 = vmatprep.subr.mxu0 0.0
        %1421 = vmatpush1.msra.mxu0 0.0
        %1422 = vmatprep.subr.mxu0 0.0
        %1423 = vmatpush1.msra.mxu0 0.0
        %1424 = vmatprep.subr.mxu0 0.0
        %1425 = vmatpush1.msra.mxu0 0.0
        %1426 = vmatprep.subr.mxu0 0.0
        %1427 = vmatpush1.msra.mxu0 0.0
        %1428 = vmatprep.subr.mxu0 0.0
        %1429 = vmatpush1.msra.mxu0 0.0
        %1430 = vmatprep.subr.mxu0 0.0
        %1431 = vmatpush1.msra.mxu0 0.0
        %1432 = vmatprep.subr.mxu0 0.0
        %1433 = vmatpush1.msra.mxu0 0.0
        %1434 = vmatprep.subr.mxu0 0.0
        %1435 = vmatpush1.msra.mxu0 0.0
        %1436 = vmatprep.subr.mxu0 0.0
        %1437 = vmatpush1.msra.mxu0 0.0
        %1438 = vmatprep.mubr.f32.mxu0 0.0
        %1439 = vmatmul.mubr.f32.gmra.mrb[0].mxu0 %v1372
        %v1440 = vpop.f32.mrb[0].mxu0
        %v1441 = vadd.f32 0.0, %v1440
        %v1442 = vpop.f32.mrb[0].mxu0
        %v1443 = vadd.f32 0.0, %v1442
        %1444 = vdwg.mxu0
        %1445 = vmatprep.subr.mxu0 0.0
        %1446 = vmatpush1.msra.mxu0 %v1364
        %1447 = vmatprep.subr.mxu0 0.0
        %1448 = vmatpush1.msra.mxu0 0.0
        %1449 = vmatprep.subr.mxu0 0.0
        %1450 = vmatpush1.msra.mxu0 0.0
        %1451 = vmatprep.subr.mxu0 0.0
        %1452 = vmatpush1.msra.mxu0 0.0
        %1453 = vmatprep.subr.mxu0 0.0
        %1454 = vmatpush1.msra.mxu0 0.0
        %1455 = vmatprep.subr.mxu0 0.0
        %1456 = vmatpush1.msra.mxu0 0.0
        %1457 = vmatprep.subr.mxu0 0.0
        %1458 = vmatpush1.msra.mxu0 0.0
        %1459 = vmatprep.subr.mxu0 0.0
        %1460 = vmatpush1.msra.mxu0 0.0
        %1461 = vmatprep.subr.mxu0 0.0
        %1462 = vmatpush1.msra.mxu0 0.0
        %1463 = vmatprep.subr.mxu0 0.0
        %1464 = vmatpush1.msra.mxu0 0.0
        %1465 = vmatprep.subr.mxu0 0.0
        %1466 = vmatpush1.msra.mxu0 0.0
        %1467 = vmatprep.subr.mxu0 0.0
        %1468 = vmatpush1.msra.mxu0 0.0
        %1469 = vmatprep.subr.mxu0 0.0
        %1470 = vmatpush1.msra.mxu0 0.0
        %1471 = vmatprep.subr.mxu0 0.0
        %1472 = vmatpush1.msra.mxu0 0.0
        %1473 = vmatprep.subr.mxu0 0.0
        %1474 = vmatpush1.msra.mxu0 0.0
        %1475 = vmatprep.subr.mxu0 0.0
        %1476 = vmatpush1.msra.mxu0 0.0
        %1477 = vmatprep.subr.mxu0 0.0
        %1478 = vmatpush1.msra.mxu0 0.0
        %1479 = vmatprep.subr.mxu0 0.0
        %1480 = vmatpush1.msra.mxu0 0.0
        %1481 = vmatprep.subr.mxu0 0.0
        %1482 = vmatpush1.msra.mxu0 0.0
        %1483 = vmatprep.subr.mxu0 0.0
        %1484 = vmatpush1.msra.mxu0 0.0
        %1485 = vmatprep.subr.mxu0 0.0
        %1486 = vmatpush1.msra.mxu0 0.0
        %1487 = vmatprep.subr.mxu0 0.0
        %1488 = vmatpush1.msra.mxu0 0.0
        %1489 = vmatprep.subr.mxu0 0.0
        %1490 = vmatpush1.msra.mxu0 0.0
        %1491 = vmatprep.subr.mxu0 0.0
        %1492 = vmatpush1.msra.mxu0 0.0
        %1493 = vmatprep.subr.mxu0 0.0
        %1494 = vmatpush1.msra.mxu0 0.0
        %1495 = vmatprep.subr.mxu0 0.0
        %1496 = vmatpush1.msra.mxu0 0.0
        %1497 = vmatprep.subr.mxu0 0.0
        %1498 = vmatpush1.msra.mxu0 0.0
        %1499 = vmatprep.subr.mxu0 0.0
        %1500 = vmatpush1.msra.mxu0 0.0
        %1501 = vmatprep.subr.mxu0 0.0
        %1502 = vmatpush1.msra.mxu0 0.0
        %1503 = vmatprep.subr.mxu0 0.0
        %1504 = vmatpush1.msra.mxu0 0.0
        %1505 = vmatprep.subr.mxu0 0.0
        %1506 = vmatpush1.msra.mxu0 0.0
        %1507 = vmatprep.subr.mxu0 0.0
        %1508 = vmatpush1.msra.mxu0 0.0
        %1509 = vmatprep.mubr.f32.mxu0 0.0
        %1510 = vmatmul.mubr.f32.gmra.mrb[0].mxu0 %v1372
        %v1511 = vpop.f32.mrb[0].mxu0
        %v1512 = vadd.f32 0.0, %v1511
        %v1513 = vpop.f32.mrb[0].mxu0
        %1514 = vdwg.mxu0
        %v1515 = vadd.f32 %v1354, %v1441
        %v1516 = vadd.f32 %v1355, %v1443
        %v1517 = vadd.f32 %v1356, %v1512
        %s1518 = scalar_lea.vmem [#allocation5], 64
        %v1519 = vld [vmem:[%s1518] sm:$0xff]
        %1520 = vrot.lane.b32.xlu0 %v242, 90
        %v1521 = vpop.permute.xlu0 %1520
        %1522 = vrot.lane.b32.xlu0 %v243, 90
        %v1523 = vpop.permute.xlu0 %1522
        %1524 = vrot.lane.b32.xlu0 %v244, 90
        %v1525 = vpop.permute.xlu0 %1524
        %vm1526 = vcmask 736256
        %v1527 = vsel %vm1526, %v1521, %v1523
        %v1528 = vsel %vm1526, %v1523, %v1525
        %v1533 = vsel %vm263, %v1519, 0
        %1535 = vmatprep.subr.mxu0 %v1528
        %1536 = vmatpush1.msra.mxu0 %v1527
        %1537 = vmatprep.subr.mxu0 0.0
        %1538 = vmatpush1.msra.mxu0 0.0
        %1539 = vmatprep.subr.mxu0 0.0
        %1540 = vmatpush1.msra.mxu0 0.0
        %1541 = vmatprep.subr.mxu0 0.0
        %1542 = vmatpush1.msra.mxu0 0.0
        %1543 = vmatprep.subr.mxu0 0.0
        %1544 = vmatpush1.msra.mxu0 0.0
        %1545 = vmatprep.subr.mxu0 0.0
        %1546 = vmatpush1.msra.mxu0 0.0
        %1547 = vmatprep.subr.mxu0 0.0
        %1548 = vmatpush1.msra.mxu0 0.0
        %1549 = vmatprep.subr.mxu0 0.0
        %1550 = vmatpush1.msra.mxu0 0.0
        %1551 = vmatprep.subr.mxu0 0.0
        %1552 = vmatpush1.msra.mxu0 0.0
        %1553 = vmatprep.subr.mxu0 0.0
        %1554 = vmatpush1.msra.mxu0 0.0
        %1555 = vmatprep.subr.mxu0 0.0
        %1556 = vmatpush1.msra.mxu0 0.0
        %1557 = vmatprep.subr.mxu0 0.0
        %1558 = vmatpush1.msra.mxu0 0.0
        %1559 = vmatprep.subr.mxu0 0.0
        %1560 = vmatpush1.msra.mxu0 0.0
        %1561 = vmatprep.subr.mxu0 0.0
        %1562 = vmatpush1.msra.mxu0 0.0
        %1563 = vmatprep.subr.mxu0 0.0
        %1564 = vmatpush1.msra.mxu0 0.0
        %1565 = vmatprep.subr.mxu0 0.0
        %1566 = vmatpush1.msra.mxu0 0.0
        %1567 = vmatprep.subr.mxu0 0.0
        %1568 = vmatpush1.msra.mxu0 0.0
        %1569 = vmatprep.subr.mxu0 0.0
        %1570 = vmatpush1.msra.mxu0 0.0
        %1571 = vmatprep.subr.mxu0 0.0
        %1572 = vmatpush1.msra.mxu0 0.0
        %1573 = vmatprep.subr.mxu0 0.0
        %1574 = vmatpush1.msra.mxu0 0.0
        %1575 = vmatprep.subr.mxu0 0.0
        %1576 = vmatpush1.msra.mxu0 0.0
        %1577 = vmatprep.subr.mxu0 0.0
        %1578 = vmatpush1.msra.mxu0 0.0
        %1579 = vmatprep.subr.mxu0 0.0
        %1580 = vmatpush1.msra.mxu0 0.0
        %1581 = vmatprep.subr.mxu0 0.0
        %1582 = vmatpush1.msra.mxu0 0.0
        %1583 = vmatprep.subr.mxu0 0.0
        %1584 = vmatpush1.msra.mxu0 0.0
        %1585 = vmatprep.subr.mxu0 0.0
        %1586 = vmatpush1.msra.mxu0 0.0
        %1587 = vmatprep.subr.mxu0 0.0
        %1588 = vmatpush1.msra.mxu0 0.0
        %1589 = vmatprep.subr.mxu0 0.0
        %1590 = vmatpush1.msra.mxu0 0.0
        %1591 = vmatprep.subr.mxu0 0.0
        %1592 = vmatpush1.msra.mxu0 0.0
        %1593 = vmatprep.subr.mxu0 0.0
        %1594 = vmatpush1.msra.mxu0 0.0
        %1595 = vmatprep.subr.mxu0 0.0
        %1596 = vmatpush1.msra.mxu0 0.0
        %1597 = vmatprep.subr.mxu0 0.0
        %1598 = vmatpush1.msra.mxu0 0.0
        %1599 = vmatprep.mubr.f32.mxu0 0.0
        %1600 = vmatmul.mubr.f32.gmra.mrb[0].mxu0 %v1533
        %v1601 = vpop.f32.mrb[0].mxu0
        %v1602 = vadd.f32 0.0, %v1601
        %v1603 = vpop.f32.mrb[0].mxu0
        %v1604 = vadd.f32 0.0, %v1603
        %1605 = vdwg.mxu0
        %1606 = vmatprep.subr.mxu0 0.0
        %1607 = vmatpush1.msra.mxu0 %v1525
        %1608 = vmatprep.subr.mxu0 0.0
        %1609 = vmatpush1.msra.mxu0 0.0
        %1610 = vmatprep.subr.mxu0 0.0
        %1611 = vmatpush1.msra.mxu0 0.0
        %1612 = vmatprep.subr.mxu0 0.0
        %1613 = vmatpush1.msra.mxu0 0.0
        %1614 = vmatprep.subr.mxu0 0.0
        %1615 = vmatpush1.msra.mxu0 0.0
        %1616 = vmatprep.subr.mxu0 0.0
        %1617 = vmatpush1.msra.mxu0 0.0
        %1618 = vmatprep.subr.mxu0 0.0
        %1619 = vmatpush1.msra.mxu0 0.0
        %1620 = vmatprep.subr.mxu0 0.0
        %1621 = vmatpush1.msra.mxu0 0.0
        %1622 = vmatprep.subr.mxu0 0.0
        %1623 = vmatpush1.msra.mxu0 0.0
        %1624 = vmatprep.subr.mxu0 0.0
        %1625 = vmatpush1.msra.mxu0 0.0
        %1626 = vmatprep.subr.mxu0 0.0
        %1627 = vmatpush1.msra.mxu0 0.0
        %1628 = vmatprep.subr.mxu0 0.0
        %1629 = vmatpush1.msra.mxu0 0.0
        %1630 = vmatprep.subr.mxu0 0.0
        %1631 = vmatpush1.msra.mxu0 0.0
        %1632 = vmatprep.subr.mxu0 0.0
        %1633 = vmatpush1.msra.mxu0 0.0
        %1634 = vmatprep.subr.mxu0 0.0
        %1635 = vmatpush1.msra.mxu0 0.0
        %1636 = vmatprep.subr.mxu0 0.0
        %1637 = vmatpush1.msra.mxu0 0.0
        %1638 = vmatprep.subr.mxu0 0.0
        %1639 = vmatpush1.msra.mxu0 0.0
        %1640 = vmatprep.subr.mxu0 0.0
        %1641 = vmatpush1.msra.mxu0 0.0
        %1642 = vmatprep.subr.mxu0 0.0
        %1643 = vmatpush1.msra.mxu0 0.0
        %1644 = vmatprep.subr.mxu0 0.0
        %1645 = vmatpush1.msra.mxu0 0.0
        %1646 = vmatprep.subr.mxu0 0.0
        %1647 = vmatpush1.msra.mxu0 0.0
        %1648 = vmatprep.subr.mxu0 0.0
        %1649 = vmatpush1.msra.mxu0 0.0
        %1650 = vmatprep.subr.mxu0 0.0
        %1651 = vmatpush1.msra.mxu0 0.0
        %1652 = vmatprep.subr.mxu0 0.0
        %1653 = vmatpush1.msra.mxu0 0.0
        %1654 = vmatprep.subr.mxu0 0.0
        %1655 = vmatpush1.msra.mxu0 0.0
        %1656 = vmatprep.subr.mxu0 0.0
        %1657 = vmatpush1.msra.mxu0 0.0
        %1658 = vmatprep.subr.mxu0 0.0
        %1659 = vmatpush1.msra.mxu0 0.0
        %1660 = vmatprep.subr.mxu0 0.0
        %1661 = vmatpush1.msra.mxu0 0.0
        %1662 = vmatprep.subr.mxu0 0.0
        %1663 = vmatpush1.msra.mxu0 0.0
        %1664 = vmatprep.subr.mxu0 0.0
        %1665 = vmatpush1.msra.mxu0 0.0
        %1666 = vmatprep.subr.mxu0 0.0
        %1667 = vmatpush1.msra.mxu0 0.0
        %1668 = vmatprep.subr.mxu0 0.0
        %1669 = vmatpush1.msra.mxu0 0.0
        %1670 = vmatprep.mubr.f32.mxu0 0.0
        %1671 = vmatmul.mubr.f32.gmra.mrb[0].mxu0 %v1533
        %v1672 = vpop.f32.mrb[0].mxu0
        %v1673 = vadd.f32 0.0, %v1672
        %v1674 = vpop.f32.mrb[0].mxu0
        %1675 = vdwg.mxu0
        %v1676 = vadd.f32 %v1515, %v1602
        %v1677 = vadd.f32 %v1516, %v1604
        %v1678 = vadd.f32 %v1517, %v1673
        %v1679 = vld [vmem:[#allocation7] sm:$0xff]
        %1681 = vset.pattern.permute.xlu0 0
        %1682 = vperm.xlu0 %1681, %v1679
        %v1683 = vpop.permute.xlu0 %1682
        %v1685 = vadd.f32 %v1676, %v1683
        %v1686 = vadd.f32 %v1677, %v1683
        %v1687 = vadd.f32 %v1678, %v1683
        %v1688 = vmul.f32 %v1685, 1.4142135
        %v1689 = vmul.f32 %v1686, 1.4142135
        %v1690 = vmul.f32 %v1687, 1.4142135
        %v1691 = vmul.f32 %v1688, 0.2
        %v1692 = vmul.f32 %v1689, 0.2
        %v1693 = vmul.f32 %v1690, 0.2
        %v1694 = vmax.f32 %v1688, %v1691
        %v1695 = vmax.f32 %v1689, %v1692
        %v1696 = vmax.f32 %v1690, %v1693
        %1697 = vst [vmem:[%s241] sm:$0xff] %v1694
        %1698 = vst [vmem:[%s241 + $0x8] sm:$0xff] %v1695
        %vm1699 = vcmask 261120
        %1700 = vst.msk [vmem:[%s241 + $0x10] sm:$0xff] %vm1699, %v1696
        %s1701 = sand.u32 %s121, 1
        %s1702 = scalar_lea.sflag [#allocation4], %s1701
        %s1703 = sand.u32 %s121, 1
        %s1704 = smul.addr %s1703, 24
        %s1705 = scalar_lea.vmem [#allocation8], %s1704
        // Predicated region
        $region45: #{tpu_custom_call.1} parent=31 // pred_check
          %p1706 = pneg %p131
        $region46: #{tpu_custom_call.1} parent=31 // pred_check_branch
          %1708 = sbr.rel (%p1706) target = $region48
        $region47: #{tpu_custom_call.1} parent=31 // pred_region
          %s1710 = ssub.s32 384, 384
          %1711 = vsyncadd %s1702, %s1710
          %s1712 = smul.addr %s26, 3
          %s1713 = smul.addr %s25, 3
          %s1714 = sadd.s32 %s1712, %s1713
          %s1715 = smul.addr %s1714, 128
          %s1716 = scalar_lea.hbm %s3, %s1715
          %s1718 = sshll.u32 %s1705, 4
          %s1719 = int_to_ptr.vmem [resolvable:$true] %s1718
          %1721 = dma.vmem_to_hbm [thread:$0]  %s1719, 384, %s1716, %s1702
        $region48: #{tpu_custom_call.1} parent=31 // pred_fallthru
          _
      $region32: #{tpu_custom_call.1} parent=5 // pred_fallthru
        _
      %p1722 = scmp.le.s32.totalorder 2, %s16
      // Predicated region
      $region49: #{tpu_custom_call.1} parent=5 // pred_check
        %p1723 = pneg %p1722
      $region50: #{tpu_custom_call.1} parent=5 // pred_check_branch
        %1725 = sbr.rel (%p1723) target = $region52
      $region51: #{tpu_custom_call.1} parent=5 // pred_region
        %s1726 = ssub.s32 %s16, 2
        // Predicated region
        $region53: #{tpu_custom_call.1} parent=51 // pred_check
          %p1727 = pneg %p137
        $region54: #{tpu_custom_call.1} parent=51 // pred_check_branch
          %1729 = sbr.rel (%p1727) target = $region56
        $region55: #{tpu_custom_call.1} parent=51 // pred_region
          %s1730 = sand.u32 %s122, 1
          %s1731 = scalar_lea.sflag [#allocation4], %s1730
          %s1732 = sand.u32 %s122, 1
          %s1733 = smul.addr %s1732, 24
          %s1734 = scalar_lea.vmem [#allocation8], %s1733
          %1735 = dma.done %s1731, 384
        $region56: #{tpu_custom_call.1} parent=51 // pred_fallthru
          _
      $region52: #{tpu_custom_call.1} parent=5 // pred_fallthru
        _
    $region6: #{tpu_custom_call.1} parent=1 // loop_footer
      %s20 = sadd.s32 1, %s16
    $region7: #{tpu_custom_call.1} parent=1 // loop_footer_branch
      %15 = sbr.rel target = $region3
    $region8: #{tpu_custom_call.1} parent=1 // loop_exit
      _
    %1736 = vsyncpa [#allocation3], 1
    %s1737 = scalar_lea.sflag [#allocation3], 1
    %1738 = vsyncpa %s1737, 1
    %1739 = vsyncpa [#allocation6], 1
    %1740 = vsyncpa [#allocation4], 1
    %s1741 = scalar_lea.sflag [#allocation4], 1
    %1742 = vsyncpa %s1741, 1

</llo_original>
